<compile_context>
chip_gen: v5e
topology: v5e:2x2
jax: 0.10.0
libtpu: 0.0.40
codegen_flags: <defaults>
</compile_context>

<pallas_src>
import jax
import jax.numpy as jnp
from jax.experimental import pallas as pl
from jax.experimental.pallas import tpu as pltpu

N_FEATS = 2048    # padded concat width  (2 x 1000 -> 2048 lanes)
N_HID = 128       # padded hidden width  (100 -> 128)
N_OUT = 128       # padded logit width   (3 -> 128, lane-dense output)
N_CLASSES = 3


def fused_kernel(x_ref, w12_ref, wh_ref, bh_ref, wo_ref, bo_ref,
                 out_ref, acc_ref):
    k = pl.program_id(0)

    @pl.when(k == 0)
    def _():
        acc_ref[...] = jnp.zeros_like(acc_ref)

    # Fused backbone matmul: x tile (B,tk) bf16 @ W12 tile (tk,2048) bf16,
    # f32 accumulation across the K grid.
    acc_ref[...] += jnp.dot(x_ref[...], w12_ref[...],
                            preferred_element_type=jnp.float32)

    @pl.when(k == pl.num_programs(0) - 1)
    def _():
        feats = acc_ref[...]                                    # (B, 2048) f32

        # Linear(2000->100) [padded to 128] + ReLU.
        # The concat bias is already folded into bh (bh_eff = b12 @ Wh + bh).
        h = jnp.dot(feats, wh_ref[...],
                    preferred_element_type=jnp.float32) + bh_ref[...]
        h = jnp.maximum(h, 0.0)

        # Linear(100->3) [padded to 128]
        logits = jnp.dot(h, wo_ref[...],
                         preferred_element_type=jnp.float32) + bo_ref[...]

        # Mask padded logit lanes so they don't perturb the softmax.
        col = jax.lax.broadcasted_iota(jnp.int32, logits.shape, 1)
        logits = jnp.where(col < N_CLASSES, logits, -jnp.inf)

        # Softmax(dim=1), denominator reciprocal on the EUP.
        m = jnp.max(logits, axis=1, keepdims=True)
        e = jnp.exp(logits - m)
        denom = jnp.sum(e, axis=1, keepdims=True)
        out_ref[...] = e * pl.reciprocal(denom, approx=True)


def _choose_k_tiling(din, max_tk=512):
    """Round Din up to a 256-multiple and pick the largest tile <= max_tk
    (multiple of 256) that divides it -> minimal zero-padded weight DMA."""
    k_pad = max(256, ((din + 255) // 256) * 256)
    tk = min(max_tk, k_pad)
    while k_pad % tk:
        tk -= 256
    return k_pad, tk


def fused_model(x_nchw, packed_params):
    """x_nchw: (B, C, H, W) float32. Returns softmax probabilities (B, 3)."""
    B = x_nchw.shape[0]
    x_flat = x_nchw.reshape(B, -1).astype(jnp.float32)   # same as torch .view(B, -1)
    din = x_flat.shape[1]

    w12, wh, bh, wo, bo = packed_params
    k_pad = w12.shape[0]
    assert k_pad >= din
    _, tk = _choose_k_tiling(din)
    assert k_pad % tk == 0
    b_pad = max(8, ((B + 7) // 8) * 8)                    # sublane-aligned batch

    x_p = jnp.zeros((b_pad, k_pad), jnp.bfloat16)
    x_p = x_p.at[:B, :din].set(x_flat.astype(jnp.bfloat16))

    nk = k_pad // tk
    grid_spec = pltpu.PrefetchScalarGridSpec(
        num_scalar_prefetch=0,
        grid=(nk,),
        in_specs=[
            pl.BlockSpec((b_pad, tk), lambda k: (0, k)),        # x
            pl.BlockSpec((tk, N_FEATS), lambda k: (k, 0)),      # fused W12 (bf16)
            pl.BlockSpec((N_FEATS, N_HID), lambda k: (0, 0)),   # Wh (2048x128)
            pl.BlockSpec((1, N_HID), lambda k: (0, 0)),         # bh (bias-folded)
            pl.BlockSpec((N_HID, N_OUT), lambda k: (0, 0)),     # Wo (128x128)
            pl.BlockSpec((1, N_OUT), lambda k: (0, 0)),         # bo
        ],
        out_specs=pl.BlockSpec((b_pad, N_OUT), lambda k: (0, 0)),
        scratch_shapes=[pltpu.VMEM((b_pad, N_FEATS), jnp.float32)],
    )

    out = pl.pallas_call(
        fused_kernel,
        out_shape=jax.ShapeDtypeStruct((b_pad, N_OUT), jnp.float32),
        grid_spec=grid_spec,
        compiler_params=pltpu.CompilerParams(
            dimension_semantics=("arbitrary",),      # K is a reduction axis
            vmem_limit_bytes=32 * 1024 * 1024,       # safe on v5e/v6e/v7x
        ),
    )(x_p, w12, wh, bh, wo, bo)

    return out[:B, :N_CLASSES]


def init_params(key, din):
    """Logical parameters (shapes follow the PyTorch module)."""
    ks = jax.random.split(key, 8)
    w1 = jax.random.normal(ks[0], (din, 1000), jnp.float32) / jnp.sqrt(din)
    b1 = jax.random.normal(ks[1], (1, 1000), jnp.float32) * 0.01
    w2 = jax.random.normal(ks[2], (din, 1000), jnp.float32) / jnp.sqrt(din)
    b2 = jax.random.normal(ks[3], (1, 1000), jnp.float32) * 0.01
    wh = jax.random.normal(ks[4], (2000, 100), jnp.float32) / jnp.sqrt(2000.0)
    bh = jax.random.normal(ks[5], (1, 100), jnp.float32) * 0.01
    wo = jax.random.normal(ks[6], (100, 3), jnp.float32) / jnp.sqrt(100.0)
    bo = jax.random.normal(ks[7], (1, 3), jnp.float32) * 0.01
    return dict(w1=w1, b1=b1, w2=w2, b2=b2, wh=wh, bh=bh, wo=wo, bo=bo)


def pack_params(p):
    """Fuse/pad logical params into the kernel's aligned layout."""
    din = p["w1"].shape[0]
    k_pad, _ = _choose_k_tiling(din)

    # Fused backbone weight, bf16 to halve HBM traffic (the dominant bytes).
    w12 = jnp.zeros((k_pad, N_FEATS), jnp.float32)
    w12 = w12.at[:din, :1000].set(p["w1"]).at[:din, 1000:2000].set(p["w2"])
    w12 = w12.astype(jnp.bfloat16)

    # Padded hidden weight.
    wh = jnp.zeros((N_FEATS, N_HID), jnp.float32).at[:2000, :100].set(p["wh"])

    # Fold the concat bias into the hidden bias: (acc + b12) @ Wh + bh
    #   == acc @ Wh + (b12 @ Wh + bh).
    b12 = jnp.zeros((1, N_FEATS), jnp.float32)
    b12 = b12.at[:, :1000].set(p["b1"]).at[:, 1000:2000].set(p["b2"])
    bh = jnp.zeros((1, N_HID), jnp.float32).at[:, :100].set(p["bh"])
    bh = bh + b12 @ wh

    wo = jnp.zeros((N_HID, N_OUT), jnp.float32).at[:100, :N_CLASSES].set(p["wo"])
    bo = jnp.zeros((1, N_OUT), jnp.float32).at[:, :N_CLASSES].set(p["bo"])
    return (w12, wh, bh, wo, bo)


def reference(x_nchw, p):
    """Pure-JAX reference of the same math (bf16 backbone weights, f32 acc)."""
    x = x_nchw.reshape(x_nchw.shape[0], -1).astype(jnp.float32)
    xb = x.astype(jnp.bfloat16).astype(jnp.float32)
    w1 = p["w1"].astype(jnp.bfloat16).astype(jnp.float32)
    w2 = p["w2"].astype(jnp.bfloat16).astype(jnp.float32)
    f1 = xb @ w1 + p["b1"]
    f2 = xb @ w2 + p["b2"]
    feats = jnp.concatenate([f1, f2], axis=1)
    h = jnp.maximum(feats @ p["wh"] + p["bh"], 0.0)
    logits = h @ p["wo"] + p["bo"]
    return jax.nn.softmax(logits, axis=1)


if __name__ == "__main__":
    # Small ImageNet-like input: batch=2, 3 channels, 16x16 spatial (Din=768).
    B, C, H, W = 2, 3, 16, 16
    kx, kp = jax.random.split(jax.random.PRNGKey(0))
    x = jax.random.normal(kx, (B, C, H, W), jnp.float32)

    logical = init_params(kp, C * H * W)
    packed = pack_params(logical)

    out = jax.block_until_ready(fused_model(x, packed))
    ref = reference(x, logical)

    assert out.shape == (B, 3)
    # approx reciprocal + tiled f32 accumulation -> slightly loosened tolerance
    assert jnp.allclose(out, ref, atol=2e-3, rtol=2e-3)
    assert jnp.allclose(jnp.sum(out, axis=1), jnp.ones((B,)), atol=2e-3)

    print("KERNEL_OK")
</pallas_src>

<mosaic_0001>
module attributes {stable_mosaic.version = 11 : i64} {
  func.func @fused_kernel(%arg0: i32, %arg1: memref<8x256xbf16, #tpu.memory_space<vmem>>, %arg2: memref<256x2048xbf16, #tpu.memory_space<vmem>>, %arg3: memref<2048x128xf32, #tpu.memory_space<vmem>>, %arg4: memref<1x128xf32, #tpu.memory_space<vmem>>, %arg5: memref<128x128xf32, #tpu.memory_space<vmem>>, %arg6: memref<1x128xf32, #tpu.memory_space<vmem>>, %arg7: memref<8x128xf32, #tpu.memory_space<vmem>>, %arg8: memref<8x2048xf32, #tpu.memory_space<vmem>>) attributes {dimension_semantics = [#tpu.dimension_semantics<arbitrary>], iteration_bounds = array<i64: 3>, scalar_prefetch = 0 : i64, scratch_operands = 1 : i64, tpu.core_type = #tpu.core_type<tc>, window_params = [{transform_indices = @transform_0, window_bounds = array<i64: 8, 256>}, {transform_indices = @transform_1, window_bounds = array<i64: 256, 2048>}, {pipeline_mode = #tpu.pipeline_mode<synchronous>, transform_indices = @transform_2, window_bounds = array<i64: 2048, 128>}, {pipeline_mode = #tpu.pipeline_mode<synchronous>, transform_indices = @transform_3, window_bounds = array<i64: 1, 128>}, {pipeline_mode = #tpu.pipeline_mode<synchronous>, transform_indices = @transform_4, window_bounds = array<i64: 128, 128>}, {pipeline_mode = #tpu.pipeline_mode<synchronous>, transform_indices = @transform_5, window_bounds = array<i64: 1, 128>}, {pipeline_mode = #tpu.pipeline_mode<synchronous>, transform_indices = @transform_6, window_bounds = array<i64: 8, 128>}]} {
    %c0_i32 = arith.constant 0 : i32
    %0 = arith.cmpi eq, %arg0, %c0_i32 : i32
    %1 = arith.extui %0 : i1 to i32
    %c0_i32_0 = arith.constant 0 : i32
    %2 = arith.cmpi ne, %1, %c0_i32_0 : i32
    scf.if %2 {
      %cst_9 = arith.constant 0.000000e+00 : f32
      %12 = vector.broadcast %cst_9 : f32 to vector<8x2048xf32>
      %c0_10 = arith.constant 0 : index
      %c0_11 = arith.constant 0 : index
      %13 = vector.load %arg8[%c0_10, %c0_11] : memref<8x2048xf32, #tpu.memory_space<vmem>>, vector<8x2048xf32>
      tpu.vector_store %arg8[%c0_10, %c0_11], %12 {strides = array<i32>} : memref<8x2048xf32, #tpu.memory_space<vmem>>, vector<8x2048xf32>,
    } else {
    }
    %c0 = arith.constant 0 : index
    %c0_1 = arith.constant 0 : index
    %3 = vector.load %arg8[%c0, %c0_1] : memref<8x2048xf32, #tpu.memory_space<vmem>>, vector<8x2048xf32>
    %c0_2 = arith.constant 0 : index
    %c0_3 = arith.constant 0 : index
    %4 = vector.load %arg1[%c0_2, %c0_3] : memref<8x256xbf16, #tpu.memory_space<vmem>>, vector<8x256xbf16>
    %c0_4 = arith.constant 0 : index
    %c0_5 = arith.constant 0 : index
    %5 = vector.load %arg2[%c0_4, %c0_5] : memref<256x2048xbf16, #tpu.memory_space<vmem>>, vector<256x2048xbf16>
    %cst = arith.constant dense<0.000000e+00> : vector<8x2048xf32>
    %6 = tpu.matmul %4, %5, %cst {dimension_numbers = #tpu.dot_dimension_numbers<[1], [0], [0], [1], [0, 0, 1, 1], [], []>} : vector<8x256xbf16>, vector<256x2048xbf16>, vector<8x2048xf32> -> vector<8x2048xf32>
    %7 = arith.addf %3, %6 : vector<8x2048xf32>
    %c0_6 = arith.constant 0 : index
    %c0_7 = arith.constant 0 : index
    %8 = vector.load %arg8[%c0_6, %c0_7] : memref<8x2048xf32, #tpu.memory_space<vmem>>, vector<8x2048xf32>
    tpu.vector_store %arg8[%c0_6, %c0_7], %7 {strides = array<i32>} : memref<8x2048xf32, #tpu.memory_space<vmem>>, vector<8x2048xf32>,
    %c2_i32 = arith.constant 2 : i32
    %9 = arith.cmpi eq, %arg0, %c2_i32 : i32
    %10 = arith.extui %9 : i1 to i32
    %c0_i32_8 = arith.constant 0 : i32
    %11 = arith.cmpi ne, %10, %c0_i32_8 : i32
    scf.if %11 {
      %c0_9 = arith.constant 0 : index
      %c0_10 = arith.constant 0 : index
      %12 = vector.load %arg8[%c0_9, %c0_10] : memref<8x2048xf32, #tpu.memory_space<vmem>>, vector<8x2048xf32>
      %c0_11 = arith.constant 0 : index
      %c0_12 = arith.constant 0 : index
      %13 = vector.load %arg3[%c0_11, %c0_12] : memref<2048x128xf32, #tpu.memory_space<vmem>>, vector<2048x128xf32>
      %cst_13 = arith.constant dense<0.000000e+00> : vector<8x128xf32>
      %14 = tpu.matmul %12, %13, %cst_13 {dimension_numbers = #tpu.dot_dimension_numbers<[1], [0], [0], [1], [0, 0, 1, 1], [], []>} : vector<8x2048xf32>, vector<2048x128xf32>, vector<8x128xf32> -> vector<8x128xf32>
      %c0_14 = arith.constant 0 : index
      %c0_15 = arith.constant 0 : index
      %15 = vector.load %arg4[%c0_14, %c0_15] : memref<1x128xf32, #tpu.memory_space<vmem>>, vector<1x128xf32>
      %16 = vector.broadcast %15 : vector<1x128xf32> to vector<8x128xf32>
      %17 = arith.addf %14, %16 : vector<8x128xf32>
      %cst_16 = arith.constant 0.000000e+00 : f32
      %18 = vector.broadcast %cst_16 : f32 to vector<8x128xf32>
      %19 = arith.maximumf %17, %18 : vector<8x128xf32>
      %c0_17 = arith.constant 0 : index
      %c0_18 = arith.constant 0 : index
      %20 = vector.load %arg5[%c0_17, %c0_18] : memref<128x128xf32, #tpu.memory_space<vmem>>, vector<128x128xf32>
      %cst_19 = arith.constant dense<0.000000e+00> : vector<8x128xf32>
      %21 = tpu.matmul %19, %20, %cst_19 {dimension_numbers = #tpu.dot_dimension_numbers<[1], [0], [0], [1], [0, 0, 1, 1], [], []>} : vector<8x128xf32>, vector<128x128xf32>, vector<8x128xf32> -> vector<8x128xf32>
      %c0_20 = arith.constant 0 : index
      %c0_21 = arith.constant 0 : index
      %22 = vector.load %arg6[%c0_20, %c0_21] : memref<1x128xf32, #tpu.memory_space<vmem>>, vector<1x128xf32>
      %23 = vector.broadcast %22 : vector<1x128xf32> to vector<8x128xf32>
      %24 = arith.addf %21, %23 : vector<8x128xf32>
      %25 = tpu.iota {dimensions = array<i32: 1>} : vector<8x128xi32>
      %c3_i32 = arith.constant 3 : i32
      %26 = vector.broadcast %c3_i32 : i32 to vector<8x128xi32>
      %27 = arith.cmpi slt, %25, %26 : vector<8x128xi32>
      %cst_22 = arith.constant 0xFF800000 : f32
      %28 = vector.broadcast %cst_22 : f32 to vector<8x128xf32>
      %29 = arith.select %27, %24, %28 : vector<8x128xi1>, vector<8x128xf32>
      %cst_23 = arith.constant dense<0xFF800000> : vector<8xf32>
      %30 = vector.multi_reduction <maximumf>, %29, %cst_23 [1] : vector<8x128xf32> to vector<8xf32>
      %31 = vector.shape_cast %30 : vector<8xf32> to vector<8x1xf32>
      %32 = vector.broadcast %31 : vector<8x1xf32> to vector<8x128xf32>
      %33 = arith.subf %29, %32 : vector<8x128xf32>
      %34 = math.exp %33 : vector<8x128xf32>
      %cst_24 = arith.constant dense<0.000000e+00> : vector<8xf32>
      %35 = vector.multi_reduction <add>, %34, %cst_24 [1] : vector<8x128xf32> to vector<8xf32>
      %36 = vector.shape_cast %35 : vector<8xf32> to vector<8x1xf32>
      %37 = tpu.reciprocal %36 {approx = true} : vector<8x1xf32> -> vector<8x1xf32>
      %38 = vector.broadcast %37 : vector<8x1xf32> to vector<8x128xf32>
      %39 = arith.mulf %34, %38 : vector<8x128xf32>
      %c0_25 = arith.constant 0 : index
      %c0_26 = arith.constant 0 : index
      %40 = vector.load %arg7[%c0_25, %c0_26] : memref<8x128xf32, #tpu.memory_space<vmem>>, vector<8x128xf32>
      tpu.vector_store %arg7[%c0_25, %c0_26], %39 {strides = array<i32>} : memref<8x128xf32, #tpu.memory_space<vmem>>, vector<8x128xf32>,
    } else {
    }
    return
  }
  func.func @transform_0(%arg0: i32) -> (i32, i32) {
    %c0_i32 = arith.constant 0 : i32
    %c0_i32_0 = arith.constant 0 : i32
    return %c0_i32, %arg0 : i32, i32
  }
  func.func @transform_1(%arg0: i32) -> (i32, i32) {
    %c0_i32 = arith.constant 0 : i32
    %c0_i32_0 = arith.constant 0 : i32
    return %arg0, %c0_i32 : i32, i32
  }
  func.func @transform_2(%arg0: i32) -> (i32, i32) {
    %c0_i32 = arith.constant 0 : i32
    %c0_i32_0 = arith.constant 0 : i32
    %c0_i32_1 = arith.constant 0 : i32
    return %c0_i32, %c0_i32_0 : i32, i32
  }
  func.func @transform_3(%arg0: i32) -> (i32, i32) {
    %c0_i32 = arith.constant 0 : i32
    %c0_i32_0 = arith.constant 0 : i32
    %c0_i32_1 = arith.constant 0 : i32
    return %c0_i32, %c0_i32_0 : i32, i32
  }
  func.func @transform_4(%arg0: i32) -> (i32, i32) {
    %c0_i32 = arith.constant 0 : i32
    %c0_i32_0 = arith.constant 0 : i32
    %c0_i32_1 = arith.constant 0 : i32
    return %c0_i32, %c0_i32_0 : i32, i32
  }
  func.func @transform_5(%arg0: i32) -> (i32, i32) {
    %c0_i32 = arith.constant 0 : i32
    %c0_i32_0 = arith.constant 0 : i32
    %c0_i32_1 = arith.constant 0 : i32
    return %c0_i32, %c0_i32_0 : i32, i32
  }
  func.func @transform_6(%arg0: i32) -> (i32, i32) {
    %c0_i32 = arith.constant 0 : i32
    %c0_i32_0 = arith.constant 0 : i32
    %c0_i32_1 = arith.constant 0 : i32
    return %c0_i32, %c0_i32_0 : i32, i32
  }
}

</mosaic_0001>

<llo_original>
// kernel: tpu_custom_call.1
$region0: #{tpu_custom_call.1}
  #allocation0 [shape = 'u32[]', space=smem, size = 0x4, offset = 0x4, fixed_abs, tag = 'smem constant byte address 0x4 - core index']
  #allocation1 [shape = 'u32[72,128]{1,0:T(1,128)}', space=vmem, size = 0x9000, scoped, tag = 'internal scratch']
  #allocation2 [shape = 'f32[8,2048]{1,0:T(8,128)}', space=vmem, size = 0x10000, scoped, tag = 'scratch operand']
  %s0 = inlined_call_operand.hbm [shape: bf16[8,768], index: 0, kind: input, shape index: {}]
  %s1 = inlined_call_operand.hbm [shape: bf16[768,2048], index: 1, kind: input, shape index: {}]
  %s2 = inlined_call_operand.hbm [shape: f32[2048,128], index: 2, kind: input, shape index: {}]
  %s3 = inlined_call_operand.hbm [shape: f32[1,128], index: 3, kind: input, shape index: {}]
  %s4 = inlined_call_operand.hbm [shape: f32[128,128], index: 4, kind: input, shape index: {}]
  %s5 = inlined_call_operand.hbm [shape: f32[1,128], index: 5, kind: input, shape index: {}]
  %s6 = inlined_call_operand.hbm [shape: f32[8,128], index: 6, kind: output, shape index: {}]
  %s7 = sld [smem:[#allocation0]]
  $region89: #{tpu_custom_call.1} parent=0
    _
  %s9 = ssub.s32 1, %s7
  %s10 = scalar_select 0, %s9, %s7
  $region1: #{tpu_custom_call.1} parent=0
    #allocation3 [shape = 'u8[8192]{0}', space=vmem, size = 0x2000, scoped, tag = 'input window, operand 0']
    #allocation4 [shape = 's32[2]{0}', space=sflag, size = 0x8, scoped, tag = 'scoped memory for tpu_custom_call.1']
    #allocation5 [shape = 's32[2]{0}', space=sflag, size = 0x8, scoped, tag = 'scoped memory for tpu_custom_call.1']
    #allocation6 [shape = 'u8[2097152]{0}', space=vmem, size = 0x200000, scoped, tag = 'input window, operand 1']
    #allocation7 [shape = 's32[2]{0}', space=sflag, size = 0x8, scoped, tag = 'scoped memory for tpu_custom_call.1']
    #allocation8 [shape = 'u8[1048576]{0}', space=vmem, size = 0x100000, scoped, tag = 'input window, operand 2, single buffered']
    #allocation9 [shape = 'u8[512]{0}', space=vmem, size = 0x400, scoped, tag = 'input window, operand 3, single buffered']
    #allocation10 [shape = 's32[1]{0}', space=sflag, size = 0x4, scoped, tag = 'scoped memory for tpu_custom_call.1']
    #allocation11 [shape = 'u8[65536]{0}', space=vmem, size = 0x10000, scoped, tag = 'input window, operand 4, single buffered']
    #allocation12 [shape = 'u8[512]{0}', space=vmem, size = 0x400, scoped, tag = 'input window, operand 5, single buffered']
    #allocation13 [shape = 's32[1]{0}', space=sflag, size = 0x4, scoped, tag = 'scoped memory for tpu_custom_call.1']
    #allocation14 [shape = 'u8[4096]{0}', space=vmem, size = 0x1000, scoped, tag = 'output window, operand 0, single buffered']
    %11 = vsyncpa [#allocation4], 0
    %s12 = scalar_lea.sflag [#allocation4], 1
    %13 = vsyncpa %s12, 0
    %14 = vsyncpa [#allocation7], 0
    %s15 = scalar_lea.sflag [#allocation7], 1
    %16 = vsyncpa %s15, 0
    %17 = vsyncpa [#allocation10], 0
    %18 = vsyncpa [#allocation13], 0
    %19 = vsyncpa [#allocation5], 0
    loop: start=0, step=1, limit=5
    $region2: #{tpu_custom_call.1} parent=1 // loop_pre_header
      _
    $region3: #{tpu_custom_call.1} parent=1 // loop_header
      %s21 = sphi 0, %s25
      %p22 = scmp.ge.s32.totalorder %s21, 5
      %s31 = sphi 0, %s33
      %s34 = sphi 0, %s31
      %s35 = sphi 0, %s34
      %s51 = sphi 0, %s35
      %s57 = sphi 0, %s59
      %s60 = sphi 0, %s57
      %s61 = sphi 0, %s60
      %s77 = sphi 0, %s61
      %s81 = sphi 0, %s81
      %s83 = sphi 0, %s81
      %s84 = sphi 0, %s83
      %s98 = sphi 0, %s84
      %s102 = sphi 0, %s102
      %s104 = sphi 0, %s102
      %s105 = sphi 0, %s104
      %s119 = sphi 0, %s105
      %s123 = sphi 0, %s123
      %s125 = sphi 0, %s123
      %s126 = sphi 0, %s125
      %s140 = sphi 0, %s126
      %s144 = sphi 0, %s144
      %s146 = sphi 0, %s144
      %s147 = sphi 0, %s146
      %s161 = sphi 0, %s147
      %s165 = sphi 0, %s165
      %s167 = sphi 0, %s165
      %s168 = sphi 0, %s167
      %s182 = sphi 0, %s168
    $region4: #{tpu_custom_call.1} parent=1 // loop_header_branch
      %24 = sbr.rel (%p22) target = $region8
    $region5: #{tpu_custom_call.1} parent=1 // loop_body
      %s26 = ssub.s32 %s21, 1
      %s27 = ssub.s32 %s21, 2
      %s28 = sadd.s32 %s21, 1
      %s29 = ssub.s32 %s21, %s28
      %p30 = scmp.eq.s32.totalorder %s29, 0
      %s32 = sadd.s32 %s31, 1
      %s33 = scalar_select %p30, %s31, %s32
      %p36 = pneg %p30
      %p37 = scmp.eq.s32.totalorder %s21, 2
      %p38 = por %p36, %p37
      %p39 = scmp.ne.s32.totalorder %s31, %s34
      %p40 = scmp.eq.s32.totalorder %s21, 0
      %p41 = por %p39, %p40
      %p42 = scmp.ne.s32.totalorder %s31, %s34
      %p43 = scmp.eq.s32.totalorder %s26, 2
      %p44 = por %p42, %p43
      %p45 = scmp.ne.s32.totalorder %s34, %s35
      %p46 = scmp.eq.s32.totalorder %s26, 0
      %p47 = por %p45, %p46
      %p48 = scmp.ne.s32.totalorder %s34, %s35
      %p49 = scmp.eq.s32.totalorder %s27, 2
      %p50 = por %p48, %p49
      %p52 = scmp.ne.s32.totalorder %s35, %s51
      %p53 = scmp.eq.s32.totalorder %s27, 0
      %p54 = por %p52, %p53
      %s55 = ssub.s32 %s21, %s28
      %p56 = scmp.eq.s32.totalorder %s55, 0
      %s58 = sadd.s32 %s57, 1
      %s59 = scalar_select %p56, %s57, %s58
      %p62 = pneg %p56
      %p63 = scmp.eq.s32.totalorder %s21, 2
      %p64 = por %p62, %p63
      %p65 = scmp.ne.s32.totalorder %s57, %s60
      %p66 = scmp.eq.s32.totalorder %s21, 0
      %p67 = por %p65, %p66
      %p68 = scmp.ne.s32.totalorder %s57, %s60
      %p69 = scmp.eq.s32.totalorder %s26, 2
      %p70 = por %p68, %p69
      %p71 = scmp.ne.s32.totalorder %s60, %s61
      %p72 = scmp.eq.s32.totalorder %s26, 0
      %p73 = por %p71, %p72
      %p74 = scmp.ne.s32.totalorder %s60, %s61
      %p75 = scmp.eq.s32.totalorder %s27, 2
      %p76 = por %p74, %p75
      %p78 = scmp.ne.s32.totalorder %s61, %s77
      %p79 = scmp.eq.s32.totalorder %s27, 0
      %p80 = por %p78, %p79
      %s82 = sadd.s32 %s81, 1
      %p85 = scmp.eq.s32.totalorder %s21, 2
      %p86 = scmp.ne.s32.totalorder %s81, %s83
      %p87 = scmp.eq.s32.totalorder %s21, 0
      %p88 = por %p86, %p87
      %p89 = scmp.ne.s32.totalorder %s81, %s83
      %p90 = scmp.eq.s32.totalorder %s26, 2
      %p91 = por %p89, %p90
      %p92 = scmp.ne.s32.totalorder %s83, %s84
      %p93 = scmp.eq.s32.totalorder %s26, 0
      %p94 = por %p92, %p93
      %p95 = scmp.ne.s32.totalorder %s83, %s84
      %p96 = scmp.eq.s32.totalorder %s27, 2
      %p97 = por %p95, %p96
      %p99 = scmp.ne.s32.totalorder %s84, %s98
      %p100 = scmp.eq.s32.totalorder %s27, 0
      %p101 = por %p99, %p100
      %s103 = sadd.s32 %s102, 1
      %p106 = scmp.eq.s32.totalorder %s21, 2
      %p107 = scmp.ne.s32.totalorder %s102, %s104
      %p108 = scmp.eq.s32.totalorder %s21, 0
      %p109 = por %p107, %p108
      %p110 = scmp.ne.s32.totalorder %s102, %s104
      %p111 = scmp.eq.s32.totalorder %s26, 2
      %p112 = por %p110, %p111
      %p113 = scmp.ne.s32.totalorder %s104, %s105
      %p114 = scmp.eq.s32.totalorder %s26, 0
      %p115 = por %p113, %p114
      %p116 = scmp.ne.s32.totalorder %s104, %s105
      %p117 = scmp.eq.s32.totalorder %s27, 2
      %p118 = por %p116, %p117
      %p120 = scmp.ne.s32.totalorder %s105, %s119
      %p121 = scmp.eq.s32.totalorder %s27, 0
      %p122 = por %p120, %p121
      %s124 = sadd.s32 %s123, 1
      %p127 = scmp.eq.s32.totalorder %s21, 2
      %p128 = scmp.ne.s32.totalorder %s123, %s125
      %p129 = scmp.eq.s32.totalorder %s21, 0
      %p130 = por %p128, %p129
      %p131 = scmp.ne.s32.totalorder %s123, %s125
      %p132 = scmp.eq.s32.totalorder %s26, 2
      %p133 = por %p131, %p132
      %p134 = scmp.ne.s32.totalorder %s125, %s126
      %p135 = scmp.eq.s32.totalorder %s26, 0
      %p136 = por %p134, %p135
      %p137 = scmp.ne.s32.totalorder %s125, %s126
      %p138 = scmp.eq.s32.totalorder %s27, 2
      %p139 = por %p137, %p138
      %p141 = scmp.ne.s32.totalorder %s126, %s140
      %p142 = scmp.eq.s32.totalorder %s27, 0
      %p143 = por %p141, %p142
      %s145 = sadd.s32 %s144, 1
      %p148 = scmp.eq.s32.totalorder %s21, 2
      %p149 = scmp.ne.s32.totalorder %s144, %s146
      %p150 = scmp.eq.s32.totalorder %s21, 0
      %p151 = por %p149, %p150
      %p152 = scmp.ne.s32.totalorder %s144, %s146
      %p153 = scmp.eq.s32.totalorder %s26, 2
      %p154 = por %p152, %p153
      %p155 = scmp.ne.s32.totalorder %s146, %s147
      %p156 = scmp.eq.s32.totalorder %s26, 0
      %p157 = por %p155, %p156
      %p158 = scmp.ne.s32.totalorder %s146, %s147
      %p159 = scmp.eq.s32.totalorder %s27, 2
      %p160 = por %p158, %p159
      %p162 = scmp.ne.s32.totalorder %s147, %s161
      %p163 = scmp.eq.s32.totalorder %s27, 0
      %p164 = por %p162, %p163
      %s166 = sadd.s32 %s165, 1
      %p169 = scmp.eq.s32.totalorder %s21, 2
      %p170 = scmp.ne.s32.totalorder %s165, %s167
      %p171 = scmp.eq.s32.totalorder %s21, 0
      %p172 = por %p170, %p171
      %p173 = scmp.ne.s32.totalorder %s165, %s167
      %p174 = scmp.eq.s32.totalorder %s26, 2
      %p175 = por %p173, %p174
      %p176 = scmp.ne.s32.totalorder %s167, %s168
      %p177 = scmp.eq.s32.totalorder %s26, 0
      %p178 = por %p176, %p177
      %p179 = scmp.ne.s32.totalorder %s167, %s168
      %p180 = scmp.eq.s32.totalorder %s27, 2
      %p181 = por %p179, %p180
      %p183 = scmp.ne.s32.totalorder %s168, %s182
      %p184 = scmp.eq.s32.totalorder %s27, 0
      %p185 = por %p183, %p184
      %p186 = scmp.le.s32.totalorder 1, %s21
      %p187 = scmp.lt.s32.totalorder %s21, 4
      %p188 = pnand %p186, %p187
      %p189 = pneg %p188
      // Predicated region
      $region9: #{tpu_custom_call.1} parent=5 // pred_check
        _
      $region10: #{tpu_custom_call.1} parent=5 // pred_check_branch
        %191 = sbr.rel (%p188) target = $region12
      $region11: #{tpu_custom_call.1} parent=5 // pred_region
        %s192 = ssub.s32 %s21, 1
        // Predicated region
        $region13: #{tpu_custom_call.1} parent=11 // pred_check
          %p193 = pneg %p94
        $region14: #{tpu_custom_call.1} parent=11 // pred_check_branch
          %195 = sbr.rel (%p193) target = $region16
        $region15: #{tpu_custom_call.1} parent=11 // pred_region
          %197 = vsyncadd [#allocation7], 0
          %s198 = sshll.u32 %s2, 4
          %s199 = int_to_ptr.hbm [resolvable:$true] %s198
          %s200 = sshll.u32 [#allocation8], 4
          %s201 = int_to_ptr.vmem [resolvable:$true] %s200
          %206 = dma.hbm_to_vmem [thread:$0]  %s199, 32768, %s201, [#allocation7], 128, 128, 8
        $region16: #{tpu_custom_call.1} parent=11 // pred_fallthru
          _
        // Predicated region
        $region17: #{tpu_custom_call.1} parent=11 // pred_check
          %p207 = pneg %p115
        $region18: #{tpu_custom_call.1} parent=11 // pred_check_branch
          %209 = sbr.rel (%p207) target = $region20
        $region19: #{tpu_custom_call.1} parent=11 // pred_region
          %211 = vsyncadd [#allocation10], 0
          %s213 = sshll.u32 %s3, 4
          %s214 = int_to_ptr.hbm [resolvable:$true] %s213
          %s215 = sshll.u32 [#allocation9], 4
          %s216 = int_to_ptr.vmem [resolvable:$true] %s215
          %218 = dma.hbm_to_vmem [thread:$0]  %s214, 16, %s216, [#allocation10]
        $region20: #{tpu_custom_call.1} parent=11 // pred_fallthru
          _
        // Predicated region
        $region21: #{tpu_custom_call.1} parent=11 // pred_check
          %p219 = pneg %p136
        $region22: #{tpu_custom_call.1} parent=11 // pred_check_branch
          %221 = sbr.rel (%p219) target = $region24
        $region23: #{tpu_custom_call.1} parent=11 // pred_region
          %223 = vsyncadd [#allocation10], 0
          %s224 = sshll.u32 %s4, 4
          %s225 = int_to_ptr.hbm [resolvable:$true] %s224
          %s226 = sshll.u32 [#allocation11], 4
          %s227 = int_to_ptr.vmem [resolvable:$true] %s226
          %232 = dma.hbm_to_vmem [thread:$0]  %s225, 2048, %s227, [#allocation10], 128, 128, 8
        $region24: #{tpu_custom_call.1} parent=11 // pred_fallthru
          _
        // Predicated region
        $region25: #{tpu_custom_call.1} parent=11 // pred_check
          %p233 = pneg %p157
        $region26: #{tpu_custom_call.1} parent=11 // pred_check_branch
          %235 = sbr.rel (%p233) target = $region28
        $region27: #{tpu_custom_call.1} parent=11 // pred_region
          %237 = vsyncadd [#allocation13], 0
          %s239 = sshll.u32 %s5, 4
          %s240 = int_to_ptr.hbm [resolvable:$true] %s239
          %s241 = sshll.u32 [#allocation12], 4
          %s242 = int_to_ptr.vmem [resolvable:$true] %s241
          %244 = dma.hbm_to_vmem [thread:$0]  %s240, 16, %s242, [#allocation13]
        $region28: #{tpu_custom_call.1} parent=11 // pred_fallthru
          _
      $region12: #{tpu_custom_call.1} parent=5 // pred_fallthru
        _
      %p245 = scmp.lt.s32.totalorder %s21, 3
      // Predicated region
      $region29: #{tpu_custom_call.1} parent=5 // pred_check
        %p246 = pneg %p245
      $region30: #{tpu_custom_call.1} parent=5 // pred_check_branch
        %248 = sbr.rel (%p246) target = $region32
      $region31: #{tpu_custom_call.1} parent=5 // pred_region
        // Predicated region
        $region33: #{tpu_custom_call.1} parent=31 // pred_check
          %p249 = pneg %p41
        $region34: #{tpu_custom_call.1} parent=31 // pred_check_branch
          %251 = sbr.rel (%p249) target = $region36
        $region35: #{tpu_custom_call.1} parent=31 // pred_region
          %s252 = sand.u32 %s31, 1
          %s253 = scalar_lea.sflag [#allocation4], %s252
          %s254 = sand.u32 %s31, 1
          %s255 = smul.addr %s254, 8
          %s256 = scalar_lea.vmem [#allocation3], %s255
          %s257 = smul.u32 2, %s21
          %259 = vsyncadd %s253, 0
          %s260 = smul.addr %s257, 4
          %s261 = scalar_lea.hbm %s0, %s260
          %s263 = sshll.u32 %s261, 4
          %s264 = int_to_ptr.hbm [resolvable:$true] %s263
          %s265 = sshll.u32 %s256, 4
          %s266 = int_to_ptr.vmem [resolvable:$true] %s265
          %268 = dma.hbm_to_vmem [thread:$0]  %s264, 128, %s266, %s253
        $region36: #{tpu_custom_call.1} parent=31 // pred_fallthru
          _
        // Predicated region
        $region37: #{tpu_custom_call.1} parent=31 // pred_check
          %p269 = pneg %p67
        $region38: #{tpu_custom_call.1} parent=31 // pred_check_branch
          %271 = sbr.rel (%p269) target = $region40
        $region39: #{tpu_custom_call.1} parent=31 // pred_region
          %s272 = sand.u32 %s21, 1
          %s273 = scalar_lea.sflag [#allocation7], %s272
          %s274 = sand.u32 %s57, 1
          %s275 = smul.addr %s274, 2048
          %s276 = scalar_lea.vmem [#allocation6], %s275
          %s277 = smul.u32 32, %s21
          %279 = vsyncadd %s273, 0
          %s280 = smul.addr %s277, 16
          %s281 = smul.addr %s280, 4
          %s282 = scalar_lea.hbm %s1, %s281
          %s283 = sshll.u32 %s282, 4
          %s284 = int_to_ptr.hbm [resolvable:$true] %s283
          %s285 = sshll.u32 %s276, 4
          %s286 = int_to_ptr.vmem [resolvable:$true] %s285
          %291 = dma.hbm_to_vmem [thread:$0]  %s284, 32768, %s286, %s273, 1024, 1024, 64
        $region40: #{tpu_custom_call.1} parent=31 // pred_fallthru
          _
      $region32: #{tpu_custom_call.1} parent=5 // pred_fallthru
        _
      %p292 = scmp.le.s32.totalorder 1, %s21
      %p293 = scmp.lt.s32.totalorder %s21, 4
      %p294 = pnand %p292, %p293
      %p295 = pneg %p294
      // Predicated region
      $region41: #{tpu_custom_call.1} parent=5 // pred_check
        _
      $region42: #{tpu_custom_call.1} parent=5 // pred_check_branch
        %297 = sbr.rel (%p294) target = $region44
      $region43: #{tpu_custom_call.1} parent=5 // pred_region
        %s298 = ssub.s32 %s21, 1
        %s299 = sand.u32 %s34, 1
        %s300 = scalar_lea.sflag [#allocation4], %s299
        %s301 = sand.u32 %s34, 1
        %s302 = smul.addr %s301, 8
        %s303 = scalar_lea.vmem [#allocation3], %s302
        // Predicated region
        $region45: #{tpu_custom_call.1} parent=43 // pred_check
          %p304 = pneg %p47
        $region46: #{tpu_custom_call.1} parent=43 // pred_check_branch
          %306 = sbr.rel (%p304) target = $region48
        $region47: #{tpu_custom_call.1} parent=43 // pred_region
          %308 = dma.done %s300, 128
        $region48: #{tpu_custom_call.1} parent=43 // pred_fallthru
          _
        %s309 = sand.u32 %s26, 1
        %s310 = scalar_lea.sflag [#allocation7], %s309
        %s311 = sand.u32 %s60, 1
        %s312 = smul.addr %s311, 2048
        %s313 = scalar_lea.vmem [#allocation6], %s312
        // Predicated region
        $region49: #{tpu_custom_call.1} parent=43 // pred_check
          %p314 = pneg %p73
        $region50: #{tpu_custom_call.1} parent=43 // pred_check_branch
          %316 = sbr.rel (%p314) target = $region52
        $region51: #{tpu_custom_call.1} parent=43 // pred_region
          %318 = dma.done %s310, 32768
        $region52: #{tpu_custom_call.1} parent=43 // pred_fallthru
          _
        // Predicated region
        $region53: #{tpu_custom_call.1} parent=43 // pred_check
          %p319 = pneg %p94
        $region54: #{tpu_custom_call.1} parent=43 // pred_check_branch
          %321 = sbr.rel (%p319) target = $region56
        $region55: #{tpu_custom_call.1} parent=43 // pred_region
          %323 = dma.done [#allocation7], 32768
        $region56: #{tpu_custom_call.1} parent=43 // pred_fallthru
          _
        // Predicated region
        $region57: #{tpu_custom_call.1} parent=43 // pred_check
          %p324 = pneg %p115
        $region58: #{tpu_custom_call.1} parent=43 // pred_check_branch
          %326 = sbr.rel (%p324) target = $region60
        $region59: #{tpu_custom_call.1} parent=43 // pred_region
          %328 = dma.done [#allocation10], 16
        $region60: #{tpu_custom_call.1} parent=43 // pred_fallthru
          _
        // Predicated region
        $region61: #{tpu_custom_call.1} parent=43 // pred_check
          %p329 = pneg %p136
        $region62: #{tpu_custom_call.1} parent=43 // pred_check_branch
          %331 = sbr.rel (%p329) target = $region64
        $region63: #{tpu_custom_call.1} parent=43 // pred_region
          %333 = dma.done [#allocation10], 2048
        $region64: #{tpu_custom_call.1} parent=43 // pred_fallthru
          _
        // Predicated region
        $region65: #{tpu_custom_call.1} parent=43 // pred_check
          %p334 = pneg %p157
        $region66: #{tpu_custom_call.1} parent=43 // pred_check_branch
          %336 = sbr.rel (%p334) target = $region68
        $region67: #{tpu_custom_call.1} parent=43 // pred_region
          %338 = dma.done [#allocation13], 16
        $region68: #{tpu_custom_call.1} parent=43 // pred_fallthru
          _
        %s339 = sand.u32 %s34, 1
        %s340 = scalar_lea.sflag [#allocation4], %s339
        %s341 = sand.u32 %s34, 1
        %s342 = smul.addr %s341, 8
        %s343 = scalar_lea.vmem [#allocation3], %s342
        %p344 = pneg %p47
        %p345 = pneg %p44
        %s346 = sand.u32 %s26, 1
        %s347 = scalar_lea.sflag [#allocation7], %s346
        %s348 = sand.u32 %s60, 1
        %s349 = smul.addr %s348, 2048
        %s350 = scalar_lea.vmem [#allocation6], %s349
        %p351 = pneg %p73
        %p352 = pneg %p70
        %p353 = pneg %p94
        %p354 = pneg %p91
        %p355 = pneg %p115
        %p356 = pneg %p112
        %p357 = pneg %p136
        %p358 = pneg %p133
        %p359 = pneg %p157
        %p360 = pneg %p154
        %p361 = pneg %p178
        %p362 = pneg %p175
        %s363 = smul.u32 2, %s26
        %s364 = smul.u32 32, %s26
        %p365 = scmp.eq.s32.totalorder %s26, 0
        // Predicated region
        $region69: #{tpu_custom_call.1} parent=43 // pred_check
          %p366 = pneg %p365
        $region70: #{tpu_custom_call.1} parent=43 // pred_check_branch
          %368 = sbr.rel (%p366) target = $region72
        $region71: #{tpu_custom_call.1} parent=43 // pred_region
          %369 = vst [vmem:[#allocation2] sm:$0xff] 0.0
          %370 = vst [vmem:[#allocation2 + $0x8] sm:$0xff] 0.0
          %371 = vst [vmem:[#allocation2 + $0x10] sm:$0xff] 0.0
          %372 = vst [vmem:[#allocation2 + $0x18] sm:$0xff] 0.0
          %373 = vst [vmem:[#allocation2 + $0x20] sm:$0xff] 0.0
          %374 = vst [vmem:[#allocation2 + $0x28] sm:$0xff] 0.0
          %375 = vst [vmem:[#allocation2 + $0x30] sm:$0xff] 0.0
          %376 = vst [vmem:[#allocation2 + $0x38] sm:$0xff] 0.0
          %377 = vst [vmem:[#allocation2 + $0x40] sm:$0xff] 0.0
          %378 = vst [vmem:[#allocation2 + $0x48] sm:$0xff] 0.0
          %379 = vst [vmem:[#allocation2 + $0x50] sm:$0xff] 0.0
          %380 = vst [vmem:[#allocation2 + $0x58] sm:$0xff] 0.0
          %381 = vst [vmem:[#allocation2 + $0x60] sm:$0xff] 0.0
          %382 = vst [vmem:[#allocation2 + $0x68] sm:$0xff] 0.0
          %383 = vst [vmem:[#allocation2 + $0x70] sm:$0xff] 0.0
          %384 = vst [vmem:[#allocation2 + $0x78] sm:$0xff] 0.0
        $region72: #{tpu_custom_call.1} parent=43 // pred_fallthru
          _
        %v385 = vld [vmem:[#allocation2] sm:$0xff]
        %v386 = vld [vmem:[#allocation2 + $0x8] sm:$0xff]
        %v387 = vld [vmem:[#allocation2 + $0x10] sm:$0xff]
        %v388 = vld [vmem:[#allocation2 + $0x18] sm:$0xff]
        %v389 = vld [vmem:[#allocation2 + $0x20] sm:$0xff]
        %v390 = vld [vmem:[#allocation2 + $0x28] sm:$0xff]
        %v391 = vld [vmem:[#allocation2 + $0x30] sm:$0xff]
        %v392 = vld [vmem:[#allocation2 + $0x38] sm:$0xff]
        %v393 = vld [vmem:[#allocation2 + $0x40] sm:$0xff]
        %v394 = vld [vmem:[#allocation2 + $0x48] sm:$0xff]
        %v395 = vld [vmem:[#allocation2 + $0x50] sm:$0xff]
        %v396 = vld [vmem:[#allocation2 + $0x58] sm:$0xff]
        %v397 = vld [vmem:[#allocation2 + $0x60] sm:$0xff]
        %v398 = vld [vmem:[#allocation2 + $0x68] sm:$0xff]
        %v399 = vld [vmem:[#allocation2 + $0x70] sm:$0xff]
        %v400 = vld [vmem:[#allocation2 + $0x78] sm:$0xff]
        %v401 = vld [vmem:[%s303] sm:$0xff]
        %v402 = vld [vmem:[%s313] sm:$0xff]
        %v403 = vld [vmem:[%s313 + $0x8] sm:$0xff]
        %v404 = vld [vmem:[%s313 + $0x10] sm:$0xff]
        %v405 = vld [vmem:[%s313 + $0x18] sm:$0xff]
        %v406 = vld [vmem:[%s313 + $0x20] sm:$0xff]
        %v407 = vld [vmem:[%s313 + $0x28] sm:$0xff]
        %v408 = vld [vmem:[%s313 + $0x30] sm:$0xff]
        %v409 = vld [vmem:[%s313 + $0x38] sm:$0xff]
        %v410 = vld [vmem:[%s313 + $0x40] sm:$0xff]
        %v411 = vld [vmem:[%s313 + $0x48] sm:$0xff]
        %v412 = vld [vmem:[%s313 + $0x50] sm:$0xff]
        %v413 = vld [vmem:[%s313 + $0x58] sm:$0xff]
        %v414 = vld [vmem:[%s313 + $0x60] sm:$0xff]
        %v415 = vld [vmem:[%s313 + $0x68] sm:$0xff]
        %v416 = vld [vmem:[%s313 + $0x70] sm:$0xff]
        %v417 = vld [vmem:[%s313 + $0x78] sm:$0xff]
        %v418 = vld [vmem:[%s313 + $0x80] sm:$0xff]
        %v419 = vld [vmem:[%s313 + $0x88] sm:$0xff]
        %v420 = vld [vmem:[%s313 + $0x90] sm:$0xff]
        %v421 = vld [vmem:[%s313 + $0x98] sm:$0xff]
        %v422 = vld [vmem:[%s313 + $0xa0] sm:$0xff]
        %v423 = vld [vmem:[%s313 + $0xa8] sm:$0xff]
        %v424 = vld [vmem:[%s313 + $0xb0] sm:$0xff]
        %v425 = vld [vmem:[%s313 + $0xb8] sm:$0xff]
        %v426 = vld [vmem:[%s313 + $0xc0] sm:$0xff]
        %v427 = vld [vmem:[%s313 + $0xc8] sm:$0xff]
        %v428 = vld [vmem:[%s313 + $0xd0] sm:$0xff]
        %v429 = vld [vmem:[%s313 + $0xd8] sm:$0xff]
        %v430 = vld [vmem:[%s313 + $0xe0] sm:$0xff]
        %v431 = vld [vmem:[%s313 + $0xe8] sm:$0xff]
        %v432 = vld [vmem:[%s313 + $0xf0] sm:$0xff]
        %v433 = vld [vmem:[%s313 + $0xf8] sm:$0xff]
        %v434 = vld [vmem:[%s313 + $0x100] sm:$0xff]
        %v435 = vld [vmem:[%s313 + $0x108] sm:$0xff]
        %v436 = vld [vmem:[%s313 + $0x110] sm:$0xff]
        %v437 = vld [vmem:[%s313 + $0x118] sm:$0xff]
        %v438 = vld [vmem:[%s313 + $0x120] sm:$0xff]
        %v439 = vld [vmem:[%s313 + $0x128] sm:$0xff]
        %v440 = vld [vmem:[%s313 + $0x130] sm:$0xff]
        %v441 = vld [vmem:[%s313 + $0x138] sm:$0xff]
        %v442 = vld [vmem:[%s313 + $0x140] sm:$0xff]
        %v443 = vld [vmem:[%s313 + $0x148] sm:$0xff]
        %v444 = vld [vmem:[%s313 + $0x150] sm:$0xff]
        %v445 = vld [vmem:[%s313 + $0x158] sm:$0xff]
        %v446 = vld [vmem:[%s313 + $0x160] sm:$0xff]
        %v447 = vld [vmem:[%s313 + $0x168] sm:$0xff]
        %v448 = vld [vmem:[%s313 + $0x170] sm:$0xff]
        %v449 = vld [vmem:[%s313 + $0x178] sm:$0xff]
        %v450 = vld [vmem:[%s313 + $0x180] sm:$0xff]
        %v451 = vld [vmem:[%s313 + $0x188] sm:$0xff]
        %v452 = vld [vmem:[%s313 + $0x190] sm:$0xff]
        %v453 = vld [vmem:[%s313 + $0x198] sm:$0xff]
        %v454 = vld [vmem:[%s313 + $0x1a0] sm:$0xff]
        %v455 = vld [vmem:[%s313 + $0x1a8] sm:$0xff]
        %v456 = vld [vmem:[%s313 + $0x1b0] sm:$0xff]
        %v457 = vld [vmem:[%s313 + $0x1b8] sm:$0xff]
        %v458 = vld [vmem:[%s313 + $0x1c0] sm:$0xff]
        %v459 = vld [vmem:[%s313 + $0x1c8] sm:$0xff]
        %v460 = vld [vmem:[%s313 + $0x1d0] sm:$0xff]
        %v461 = vld [vmem:[%s313 + $0x1d8] sm:$0xff]
        %v462 = vld [vmem:[%s313 + $0x1e0] sm:$0xff]
        %v463 = vld [vmem:[%s313 + $0x1e8] sm:$0xff]
        %v464 = vld [vmem:[%s313 + $0x1f0] sm:$0xff]
        %v465 = vld [vmem:[%s313 + $0x1f8] sm:$0xff]
        %v466 = vld [vmem:[%s313 + $0x200] sm:$0xff]
        %v467 = vld [vmem:[%s313 + $0x208] sm:$0xff]
        %v468 = vld [vmem:[%s313 + $0x210] sm:$0xff]
        %v469 = vld [vmem:[%s313 + $0x218] sm:$0xff]
        %v470 = vld [vmem:[%s313 + $0x220] sm:$0xff]
        %v471 = vld [vmem:[%s313 + $0x228] sm:$0xff]
        %v472 = vld [vmem:[%s313 + $0x230] sm:$0xff]
        %v473 = vld [vmem:[%s313 + $0x238] sm:$0xff]
        %v474 = vld [vmem:[%s313 + $0x240] sm:$0xff]
        %v475 = vld [vmem:[%s313 + $0x248] sm:$0xff]
        %v476 = vld [vmem:[%s313 + $0x250] sm:$0xff]
        %v477 = vld [vmem:[%s313 + $0x258] sm:$0xff]
        %v478 = vld [vmem:[%s313 + $0x260] sm:$0xff]
        %v479 = vld [vmem:[%s313 + $0x268] sm:$0xff]
        %v480 = vld [vmem:[%s313 + $0x270] sm:$0xff]
        %v481 = vld [vmem:[%s313 + $0x278] sm:$0xff]
        %v482 = vld [vmem:[%s313 + $0x280] sm:$0xff]
        %v483 = vld [vmem:[%s313 + $0x288] sm:$0xff]
        %v484 = vld [vmem:[%s313 + $0x290] sm:$0xff]
        %v485 = vld [vmem:[%s313 + $0x298] sm:$0xff]
        %v486 = vld [vmem:[%s313 + $0x2a0] sm:$0xff]
        %v487 = vld [vmem:[%s313 + $0x2a8] sm:$0xff]
        %v488 = vld [vmem:[%s313 + $0x2b0] sm:$0xff]
        %v489 = vld [vmem:[%s313 + $0x2b8] sm:$0xff]
        %v490 = vld [vmem:[%s313 + $0x2c0] sm:$0xff]
        %v491 = vld [vmem:[%s313 + $0x2c8] sm:$0xff]
        %v492 = vld [vmem:[%s313 + $0x2d0] sm:$0xff]
        %v493 = vld [vmem:[%s313 + $0x2d8] sm:$0xff]
        %v494 = vld [vmem:[%s313 + $0x2e0] sm:$0xff]
        %v495 = vld [vmem:[%s313 + $0x2e8] sm:$0xff]
        %v496 = vld [vmem:[%s313 + $0x2f0] sm:$0xff]
        %v497 = vld [vmem:[%s313 + $0x2f8] sm:$0xff]
        %v498 = vld [vmem:[%s313 + $0x300] sm:$0xff]
        %v499 = vld [vmem:[%s313 + $0x308] sm:$0xff]
        %v500 = vld [vmem:[%s313 + $0x310] sm:$0xff]
        %v501 = vld [vmem:[%s313 + $0x318] sm:$0xff]
        %v502 = vld [vmem:[%s313 + $0x320] sm:$0xff]
        %v503 = vld [vmem:[%s313 + $0x328] sm:$0xff]
        %v504 = vld [vmem:[%s313 + $0x330] sm:$0xff]
        %v505 = vld [vmem:[%s313 + $0x338] sm:$0xff]
        %v506 = vld [vmem:[%s313 + $0x340] sm:$0xff]
        %v507 = vld [vmem:[%s313 + $0x348] sm:$0xff]
        %v508 = vld [vmem:[%s313 + $0x350] sm:$0xff]
        %v509 = vld [vmem:[%s313 + $0x358] sm:$0xff]
        %v510 = vld [vmem:[%s313 + $0x360] sm:$0xff]
        %v511 = vld [vmem:[%s313 + $0x368] sm:$0xff]
        %v512 = vld [vmem:[%s313 + $0x370] sm:$0xff]
        %v513 = vld [vmem:[%s313 + $0x378] sm:$0xff]
        %v514 = vld [vmem:[%s313 + $0x380] sm:$0xff]
        %v515 = vld [vmem:[%s313 + $0x388] sm:$0xff]
        %v516 = vld [vmem:[%s313 + $0x390] sm:$0xff]
        %v517 = vld [vmem:[%s313 + $0x398] sm:$0xff]
        %v518 = vld [vmem:[%s313 + $0x3a0] sm:$0xff]
        %v519 = vld [vmem:[%s313 + $0x3a8] sm:$0xff]
        %v520 = vld [vmem:[%s313 + $0x3b0] sm:$0xff]
        %v521 = vld [vmem:[%s313 + $0x3b8] sm:$0xff]
        %v522 = vld [vmem:[%s313 + $0x3c0] sm:$0xff]
        %v523 = vld [vmem:[%s313 + $0x3c8] sm:$0xff]
        %v524 = vld [vmem:[%s313 + $0x3d0] sm:$0xff]
        %v525 = vld [vmem:[%s313 + $0x3d8] sm:$0xff]
        %v526 = vld [vmem:[%s313 + $0x3e0] sm:$0xff]
        %v527 = vld [vmem:[%s313 + $0x3e8] sm:$0xff]
        %v528 = vld [vmem:[%s313 + $0x3f0] sm:$0xff]
        %v529 = vld [vmem:[%s313 + $0x3f8] sm:$0xff]
        %v530 = vld [vmem:[%s313 + $0x400] sm:$0xff]
        %v531 = vld [vmem:[%s313 + $0x408] sm:$0xff]
        %v532 = vld [vmem:[%s313 + $0x410] sm:$0xff]
        %v533 = vld [vmem:[%s313 + $0x418] sm:$0xff]
        %v534 = vld [vmem:[%s313 + $0x420] sm:$0xff]
        %v535 = vld [vmem:[%s313 + $0x428] sm:$0xff]
        %v536 = vld [vmem:[%s313 + $0x430] sm:$0xff]
        %v537 = vld [vmem:[%s313 + $0x438] sm:$0xff]
        %v538 = vld [vmem:[%s313 + $0x440] sm:$0xff]
        %v539 = vld [vmem:[%s313 + $0x448] sm:$0xff]
        %v540 = vld [vmem:[%s313 + $0x450] sm:$0xff]
        %v541 = vld [vmem:[%s313 + $0x458] sm:$0xff]
        %v542 = vld [vmem:[%s313 + $0x460] sm:$0xff]
        %v543 = vld [vmem:[%s313 + $0x468] sm:$0xff]
        %v544 = vld [vmem:[%s313 + $0x470] sm:$0xff]
        %v545 = vld [vmem:[%s313 + $0x478] sm:$0xff]
        %v546 = vld [vmem:[%s313 + $0x480] sm:$0xff]
        %v547 = vld [vmem:[%s313 + $0x488] sm:$0xff]
        %v548 = vld [vmem:[%s313 + $0x490] sm:$0xff]
        %v549 = vld [vmem:[%s313 + $0x498] sm:$0xff]
        %v550 = vld [vmem:[%s313 + $0x4a0] sm:$0xff]
        %v551 = vld [vmem:[%s313 + $0x4a8] sm:$0xff]
        %v552 = vld [vmem:[%s313 + $0x4b0] sm:$0xff]
        %v553 = vld [vmem:[%s313 + $0x4b8] sm:$0xff]
        %v554 = vld [vmem:[%s313 + $0x4c0] sm:$0xff]
        %v555 = vld [vmem:[%s313 + $0x4c8] sm:$0xff]
        %v556 = vld [vmem:[%s313 + $0x4d0] sm:$0xff]
        %v557 = vld [vmem:[%s313 + $0x4d8] sm:$0xff]
        %v558 = vld [vmem:[%s313 + $0x4e0] sm:$0xff]
        %v559 = vld [vmem:[%s313 + $0x4e8] sm:$0xff]
        %v560 = vld [vmem:[%s313 + $0x4f0] sm:$0xff]
        %v561 = vld [vmem:[%s313 + $0x4f8] sm:$0xff]
        %v562 = vld [vmem:[%s313 + $0x500] sm:$0xff]
        %v563 = vld [vmem:[%s313 + $0x508] sm:$0xff]
        %v564 = vld [vmem:[%s313 + $0x510] sm:$0xff]
        %v565 = vld [vmem:[%s313 + $0x518] sm:$0xff]
        %v566 = vld [vmem:[%s313 + $0x520] sm:$0xff]
        %v567 = vld [vmem:[%s313 + $0x528] sm:$0xff]
        %v568 = vld [vmem:[%s313 + $0x530] sm:$0xff]
        %v569 = vld [vmem:[%s313 + $0x538] sm:$0xff]
        %v570 = vld [vmem:[%s313 + $0x540] sm:$0xff]
        %v571 = vld [vmem:[%s313 + $0x548] sm:$0xff]
        %v572 = vld [vmem:[%s313 + $0x550] sm:$0xff]
        %v573 = vld [vmem:[%s313 + $0x558] sm:$0xff]
        %v574 = vld [vmem:[%s313 + $0x560] sm:$0xff]
        %v575 = vld [vmem:[%s313 + $0x568] sm:$0xff]
        %v576 = vld [vmem:[%s313 + $0x570] sm:$0xff]
        %v577 = vld [vmem:[%s313 + $0x578] sm:$0xff]
        %v578 = vld [vmem:[%s313 + $0x580] sm:$0xff]
        %v579 = vld [vmem:[%s313 + $0x588] sm:$0xff]
        %v580 = vld [vmem:[%s313 + $0x590] sm:$0xff]
        %v581 = vld [vmem:[%s313 + $0x598] sm:$0xff]
        %v582 = vld [vmem:[%s313 + $0x5a0] sm:$0xff]
        %v583 = vld [vmem:[%s313 + $0x5a8] sm:$0xff]
        %v584 = vld [vmem:[%s313 + $0x5b0] sm:$0xff]
        %v585 = vld [vmem:[%s313 + $0x5b8] sm:$0xff]
        %v586 = vld [vmem:[%s313 + $0x5c0] sm:$0xff]
        %v587 = vld [vmem:[%s313 + $0x5c8] sm:$0xff]
        %v588 = vld [vmem:[%s313 + $0x5d0] sm:$0xff]
        %v589 = vld [vmem:[%s313 + $0x5d8] sm:$0xff]
        %v590 = vld [vmem:[%s313 + $0x5e0] sm:$0xff]
        %v591 = vld [vmem:[%s313 + $0x5e8] sm:$0xff]
        %v592 = vld [vmem:[%s313 + $0x5f0] sm:$0xff]
        %v593 = vld [vmem:[%s313 + $0x5f8] sm:$0xff]
        %v594 = vld [vmem:[%s313 + $0x600] sm:$0xff]
        %v595 = vld [vmem:[%s313 + $0x608] sm:$0xff]
        %v596 = vld [vmem:[%s313 + $0x610] sm:$0xff]
        %v597 = vld [vmem:[%s313 + $0x618] sm:$0xff]
        %v598 = vld [vmem:[%s313 + $0x620] sm:$0xff]
        %v599 = vld [vmem:[%s313 + $0x628] sm:$0xff]
        %v600 = vld [vmem:[%s313 + $0x630] sm:$0xff]
        %v601 = vld [vmem:[%s313 + $0x638] sm:$0xff]
        %v602 = vld [vmem:[%s313 + $0x640] sm:$0xff]
        %v603 = vld [vmem:[%s313 + $0x648] sm:$0xff]
        %v604 = vld [vmem:[%s313 + $0x650] sm:$0xff]
        %v605 = vld [vmem:[%s313 + $0x658] sm:$0xff]
        %v606 = vld [vmem:[%s313 + $0x660] sm:$0xff]
        %v607 = vld [vmem:[%s313 + $0x668] sm:$0xff]
        %v608 = vld [vmem:[%s313 + $0x670] sm:$0xff]
        %v609 = vld [vmem:[%s313 + $0x678] sm:$0xff]
        %v610 = vld [vmem:[%s313 + $0x680] sm:$0xff]
        %v611 = vld [vmem:[%s313 + $0x688] sm:$0xff]
        %v612 = vld [vmem:[%s313 + $0x690] sm:$0xff]
        %v613 = vld [vmem:[%s313 + $0x698] sm:$0xff]
        %v614 = vld [vmem:[%s313 + $0x6a0] sm:$0xff]
        %v615 = vld [vmem:[%s313 + $0x6a8] sm:$0xff]
        %v616 = vld [vmem:[%s313 + $0x6b0] sm:$0xff]
        %v617 = vld [vmem:[%s313 + $0x6b8] sm:$0xff]
        %v618 = vld [vmem:[%s313 + $0x6c0] sm:$0xff]
        %v619 = vld [vmem:[%s313 + $0x6c8] sm:$0xff]
        %v620 = vld [vmem:[%s313 + $0x6d0] sm:$0xff]
        %v621 = vld [vmem:[%s313 + $0x6d8] sm:$0xff]
        %v622 = vld [vmem:[%s313 + $0x6e0] sm:$0xff]
        %v623 = vld [vmem:[%s313 + $0x6e8] sm:$0xff]
        %v624 = vld [vmem:[%s313 + $0x6f0] sm:$0xff]
        %v625 = vld [vmem:[%s313 + $0x6f8] sm:$0xff]
        %v626 = vld [vmem:[%s313 + $0x700] sm:$0xff]
        %v627 = vld [vmem:[%s313 + $0x708] sm:$0xff]
        %v628 = vld [vmem:[%s313 + $0x710] sm:$0xff]
        %v629 = vld [vmem:[%s313 + $0x718] sm:$0xff]
        %v630 = vld [vmem:[%s313 + $0x720] sm:$0xff]
        %v631 = vld [vmem:[%s313 + $0x728] sm:$0xff]
        %v632 = vld [vmem:[%s313 + $0x730] sm:$0xff]
        %v633 = vld [vmem:[%s313 + $0x738] sm:$0xff]
        %v634 = vld [vmem:[%s313 + $0x740] sm:$0xff]
        %v635 = vld [vmem:[%s313 + $0x748] sm:$0xff]
        %v636 = vld [vmem:[%s313 + $0x750] sm:$0xff]
        %v637 = vld [vmem:[%s313 + $0x758] sm:$0xff]
        %v638 = vld [vmem:[%s313 + $0x760] sm:$0xff]
        %v639 = vld [vmem:[%s313 + $0x768] sm:$0xff]
        %v640 = vld [vmem:[%s313 + $0x770] sm:$0xff]
        %v641 = vld [vmem:[%s313 + $0x778] sm:$0xff]
        %v642 = vld [vmem:[%s313 + $0x780] sm:$0xff]
        %v643 = vld [vmem:[%s313 + $0x788] sm:$0xff]
        %v644 = vld [vmem:[%s313 + $0x790] sm:$0xff]
        %v645 = vld [vmem:[%s313 + $0x798] sm:$0xff]
        %v646 = vld [vmem:[%s313 + $0x7a0] sm:$0xff]
        %v647 = vld [vmem:[%s313 + $0x7a8] sm:$0xff]
        %v648 = vld [vmem:[%s313 + $0x7b0] sm:$0xff]
        %v649 = vld [vmem:[%s313 + $0x7b8] sm:$0xff]
        %v650 = vld [vmem:[%s313 + $0x7c0] sm:$0xff]
        %v651 = vld [vmem:[%s313 + $0x7c8] sm:$0xff]
        %v652 = vld [vmem:[%s313 + $0x7d0] sm:$0xff]
        %v653 = vld [vmem:[%s313 + $0x7d8] sm:$0xff]
        %v654 = vld [vmem:[%s313 + $0x7e0] sm:$0xff]
        %v655 = vld [vmem:[%s313 + $0x7e8] sm:$0xff]
        %v656 = vld [vmem:[%s313 + $0x7f0] sm:$0xff]
        %v657 = vld [vmem:[%s313 + $0x7f8] sm:$0xff]
        %v659 = vunpack.c.l.b16 %v401
        %v660 = vunpack.c.h.b16 %v401
        %v661 = vpack.c.b16 %v659, %v659
        %v662 = vpack.c.b16 %v660, %v660
        %v921 = vunpack.c.l.b16 %v402
        %v922 = vunpack.c.h.b16 %v402
        %v923 = vunpack.c.l.b16 %v403
        %v924 = vunpack.c.h.b16 %v403
        %v925 = vunpack.c.l.b16 %v404
        %v926 = vunpack.c.h.b16 %v404
        %v927 = vunpack.c.l.b16 %v405
        %v928 = vunpack.c.h.b16 %v405
        %v929 = vunpack.c.l.b16 %v406
        %v930 = vunpack.c.h.b16 %v406
        %v931 = vunpack.c.l.b16 %v407
        %v932 = vunpack.c.h.b16 %v407
        %v933 = vunpack.c.l.b16 %v408
        %v934 = vunpack.c.h.b16 %v408
        %v935 = vunpack.c.l.b16 %v409
        %v936 = vunpack.c.h.b16 %v409
        %v937 = vunpack.c.l.b16 %v410
        %v938 = vunpack.c.h.b16 %v410
        %v939 = vunpack.c.l.b16 %v411
        %v940 = vunpack.c.h.b16 %v411
        %v941 = vunpack.c.l.b16 %v412
        %v942 = vunpack.c.h.b16 %v412
        %v943 = vunpack.c.l.b16 %v413
        %v944 = vunpack.c.h.b16 %v413
        %v945 = vunpack.c.l.b16 %v414
        %v946 = vunpack.c.h.b16 %v414
        %v947 = vunpack.c.l.b16 %v415
        %v948 = vunpack.c.h.b16 %v415
        %v949 = vunpack.c.l.b16 %v416
        %v950 = vunpack.c.h.b16 %v416
        %v951 = vunpack.c.l.b16 %v417
        %v952 = vunpack.c.h.b16 %v417
        %v953 = vunpack.c.l.b16 %v418
        %v954 = vunpack.c.h.b16 %v418
        %v955 = vunpack.c.l.b16 %v419
        %v956 = vunpack.c.h.b16 %v419
        %v957 = vunpack.c.l.b16 %v420
        %v958 = vunpack.c.h.b16 %v420
        %v959 = vunpack.c.l.b16 %v421
        %v960 = vunpack.c.h.b16 %v421
        %v961 = vunpack.c.l.b16 %v422
        %v962 = vunpack.c.h.b16 %v422
        %v963 = vunpack.c.l.b16 %v423
        %v964 = vunpack.c.h.b16 %v423
        %v965 = vunpack.c.l.b16 %v424
        %v966 = vunpack.c.h.b16 %v424
        %v967 = vunpack.c.l.b16 %v425
        %v968 = vunpack.c.h.b16 %v425
        %v969 = vunpack.c.l.b16 %v426
        %v970 = vunpack.c.h.b16 %v426
        %v971 = vunpack.c.l.b16 %v427
        %v972 = vunpack.c.h.b16 %v427
        %v973 = vunpack.c.l.b16 %v428
        %v974 = vunpack.c.h.b16 %v428
        %v975 = vunpack.c.l.b16 %v429
        %v976 = vunpack.c.h.b16 %v429
        %v977 = vunpack.c.l.b16 %v430
        %v978 = vunpack.c.h.b16 %v430
        %v979 = vunpack.c.l.b16 %v431
        %v980 = vunpack.c.h.b16 %v431
        %v981 = vunpack.c.l.b16 %v432
        %v982 = vunpack.c.h.b16 %v432
        %v983 = vunpack.c.l.b16 %v433
        %v984 = vunpack.c.h.b16 %v433
        %v985 = vunpack.c.l.b16 %v434
        %v986 = vunpack.c.h.b16 %v434
        %v987 = vunpack.c.l.b16 %v435
        %v988 = vunpack.c.h.b16 %v435
        %v989 = vunpack.c.l.b16 %v436
        %v990 = vunpack.c.h.b16 %v436
        %v991 = vunpack.c.l.b16 %v437
        %v992 = vunpack.c.h.b16 %v437
        %v993 = vunpack.c.l.b16 %v438
        %v994 = vunpack.c.h.b16 %v438
        %v995 = vunpack.c.l.b16 %v439
        %v996 = vunpack.c.h.b16 %v439
        %v997 = vunpack.c.l.b16 %v440
        %v998 = vunpack.c.h.b16 %v440
        %v999 = vunpack.c.l.b16 %v441
        %v1000 = vunpack.c.h.b16 %v441
        %v1001 = vunpack.c.l.b16 %v442
        %v1002 = vunpack.c.h.b16 %v442
        %v1003 = vunpack.c.l.b16 %v443
        %v1004 = vunpack.c.h.b16 %v443
        %v1005 = vunpack.c.l.b16 %v444
        %v1006 = vunpack.c.h.b16 %v444
        %v1007 = vunpack.c.l.b16 %v445
        %v1008 = vunpack.c.h.b16 %v445
        %v1009 = vunpack.c.l.b16 %v446
        %v1010 = vunpack.c.h.b16 %v446
        %v1011 = vunpack.c.l.b16 %v447
        %v1012 = vunpack.c.h.b16 %v447
        %v1013 = vunpack.c.l.b16 %v448
        %v1014 = vunpack.c.h.b16 %v448
        %v1015 = vunpack.c.l.b16 %v449
        %v1016 = vunpack.c.h.b16 %v449
        %v1017 = vunpack.c.l.b16 %v450
        %v1018 = vunpack.c.h.b16 %v450
        %v1019 = vunpack.c.l.b16 %v451
        %v1020 = vunpack.c.h.b16 %v451
        %v1021 = vunpack.c.l.b16 %v452
        %v1022 = vunpack.c.h.b16 %v452
        %v1023 = vunpack.c.l.b16 %v453
        %v1024 = vunpack.c.h.b16 %v453
        %v1025 = vunpack.c.l.b16 %v454
        %v1026 = vunpack.c.h.b16 %v454
        %v1027 = vunpack.c.l.b16 %v455
        %v1028 = vunpack.c.h.b16 %v455
        %v1029 = vunpack.c.l.b16 %v456
        %v1030 = vunpack.c.h.b16 %v456
        %v1031 = vunpack.c.l.b16 %v457
        %v1032 = vunpack.c.h.b16 %v457
        %v1033 = vunpack.c.l.b16 %v458
        %v1034 = vunpack.c.h.b16 %v458
        %v1035 = vunpack.c.l.b16 %v459
        %v1036 = vunpack.c.h.b16 %v459
        %v1037 = vunpack.c.l.b16 %v460
        %v1038 = vunpack.c.h.b16 %v460
        %v1039 = vunpack.c.l.b16 %v461
        %v1040 = vunpack.c.h.b16 %v461
        %v1041 = vunpack.c.l.b16 %v462
        %v1042 = vunpack.c.h.b16 %v462
        %v1043 = vunpack.c.l.b16 %v463
        %v1044 = vunpack.c.h.b16 %v463
        %v1045 = vunpack.c.l.b16 %v464
        %v1046 = vunpack.c.h.b16 %v464
        %v1047 = vunpack.c.l.b16 %v465
        %v1048 = vunpack.c.h.b16 %v465
        %v1049 = vunpack.c.l.b16 %v466
        %v1050 = vunpack.c.h.b16 %v466
        %v1051 = vunpack.c.l.b16 %v467
        %v1052 = vunpack.c.h.b16 %v467
        %v1053 = vunpack.c.l.b16 %v468
        %v1054 = vunpack.c.h.b16 %v468
        %v1055 = vunpack.c.l.b16 %v469
        %v1056 = vunpack.c.h.b16 %v469
        %v1057 = vunpack.c.l.b16 %v470
        %v1058 = vunpack.c.h.b16 %v470
        %v1059 = vunpack.c.l.b16 %v471
        %v1060 = vunpack.c.h.b16 %v471
        %v1061 = vunpack.c.l.b16 %v472
        %v1062 = vunpack.c.h.b16 %v472
        %v1063 = vunpack.c.l.b16 %v473
        %v1064 = vunpack.c.h.b16 %v473
        %v1065 = vunpack.c.l.b16 %v474
        %v1066 = vunpack.c.h.b16 %v474
        %v1067 = vunpack.c.l.b16 %v475
        %v1068 = vunpack.c.h.b16 %v475
        %v1069 = vunpack.c.l.b16 %v476
        %v1070 = vunpack.c.h.b16 %v476
        %v1071 = vunpack.c.l.b16 %v477
        %v1072 = vunpack.c.h.b16 %v477
        %v1073 = vunpack.c.l.b16 %v478
        %v1074 = vunpack.c.h.b16 %v478
        %v1075 = vunpack.c.l.b16 %v479
        %v1076 = vunpack.c.h.b16 %v479
        %v1077 = vunpack.c.l.b16 %v480
        %v1078 = vunpack.c.h.b16 %v480
        %v1079 = vunpack.c.l.b16 %v481
        %v1080 = vunpack.c.h.b16 %v481
        %v1081 = vunpack.c.l.b16 %v482
        %v1082 = vunpack.c.h.b16 %v482
        %v1083 = vunpack.c.l.b16 %v483
        %v1084 = vunpack.c.h.b16 %v483
        %v1085 = vunpack.c.l.b16 %v484
        %v1086 = vunpack.c.h.b16 %v484
        %v1087 = vunpack.c.l.b16 %v485
        %v1088 = vunpack.c.h.b16 %v485
        %v1089 = vunpack.c.l.b16 %v486
        %v1090 = vunpack.c.h.b16 %v486
        %v1091 = vunpack.c.l.b16 %v487
        %v1092 = vunpack.c.h.b16 %v487
        %v1093 = vunpack.c.l.b16 %v488
        %v1094 = vunpack.c.h.b16 %v488
        %v1095 = vunpack.c.l.b16 %v489
        %v1096 = vunpack.c.h.b16 %v489
        %v1097 = vunpack.c.l.b16 %v490
        %v1098 = vunpack.c.h.b16 %v490
        %v1099 = vunpack.c.l.b16 %v491
        %v1100 = vunpack.c.h.b16 %v491
        %v1101 = vunpack.c.l.b16 %v492
        %v1102 = vunpack.c.h.b16 %v492
        %v1103 = vunpack.c.l.b16 %v493
        %v1104 = vunpack.c.h.b16 %v493
        %v1105 = vunpack.c.l.b16 %v494
        %v1106 = vunpack.c.h.b16 %v494
        %v1107 = vunpack.c.l.b16 %v495
        %v1108 = vunpack.c.h.b16 %v495
        %v1109 = vunpack.c.l.b16 %v496
        %v1110 = vunpack.c.h.b16 %v496
        %v1111 = vunpack.c.l.b16 %v497
        %v1112 = vunpack.c.h.b16 %v497
        %v1113 = vunpack.c.l.b16 %v498
        %v1114 = vunpack.c.h.b16 %v498
        %v1115 = vunpack.c.l.b16 %v499
        %v1116 = vunpack.c.h.b16 %v499
        %v1117 = vunpack.c.l.b16 %v500
        %v1118 = vunpack.c.h.b16 %v500
        %v1119 = vunpack.c.l.b16 %v501
        %v1120 = vunpack.c.h.b16 %v501
        %v1121 = vunpack.c.l.b16 %v502
        %v1122 = vunpack.c.h.b16 %v502
        %v1123 = vunpack.c.l.b16 %v503
        %v1124 = vunpack.c.h.b16 %v503
        %v1125 = vunpack.c.l.b16 %v504
        %v1126 = vunpack.c.h.b16 %v504
        %v1127 = vunpack.c.l.b16 %v505
        %v1128 = vunpack.c.h.b16 %v505
        %v1129 = vunpack.c.l.b16 %v506
        %v1130 = vunpack.c.h.b16 %v506
        %v1131 = vunpack.c.l.b16 %v507
        %v1132 = vunpack.c.h.b16 %v507
        %v1133 = vunpack.c.l.b16 %v508
        %v1134 = vunpack.c.h.b16 %v508
        %v1135 = vunpack.c.l.b16 %v509
        %v1136 = vunpack.c.h.b16 %v509
        %v1137 = vunpack.c.l.b16 %v510
        %v1138 = vunpack.c.h.b16 %v510
        %v1139 = vunpack.c.l.b16 %v511
        %v1140 = vunpack.c.h.b16 %v511
        %v1141 = vunpack.c.l.b16 %v512
        %v1142 = vunpack.c.h.b16 %v512
        %v1143 = vunpack.c.l.b16 %v513
        %v1144 = vunpack.c.h.b16 %v513
        %v1145 = vunpack.c.l.b16 %v514
        %v1146 = vunpack.c.h.b16 %v514
        %v1147 = vunpack.c.l.b16 %v515
        %v1148 = vunpack.c.h.b16 %v515
        %v1149 = vunpack.c.l.b16 %v516
        %v1150 = vunpack.c.h.b16 %v516
        %v1151 = vunpack.c.l.b16 %v517
        %v1152 = vunpack.c.h.b16 %v517
        %v1153 = vunpack.c.l.b16 %v518
        %v1154 = vunpack.c.h.b16 %v518
        %v1155 = vunpack.c.l.b16 %v519
        %v1156 = vunpack.c.h.b16 %v519
        %v1157 = vunpack.c.l.b16 %v520
        %v1158 = vunpack.c.h.b16 %v520
        %v1159 = vunpack.c.l.b16 %v521
        %v1160 = vunpack.c.h.b16 %v521
        %v1161 = vunpack.c.l.b16 %v522
        %v1162 = vunpack.c.h.b16 %v522
        %v1163 = vunpack.c.l.b16 %v523
        %v1164 = vunpack.c.h.b16 %v523
        %v1165 = vunpack.c.l.b16 %v524
        %v1166 = vunpack.c.h.b16 %v524
        %v1167 = vunpack.c.l.b16 %v525
        %v1168 = vunpack.c.h.b16 %v525
        %v1169 = vunpack.c.l.b16 %v526
        %v1170 = vunpack.c.h.b16 %v526
        %v1171 = vunpack.c.l.b16 %v527
        %v1172 = vunpack.c.h.b16 %v527
        %v1173 = vunpack.c.l.b16 %v528
        %v1174 = vunpack.c.h.b16 %v528
        %v1175 = vunpack.c.l.b16 %v529
        %v1176 = vunpack.c.h.b16 %v529
        %v1177 = vunpack.c.l.b16 %v530
        %v1178 = vunpack.c.h.b16 %v530
        %v1179 = vunpack.c.l.b16 %v531
        %v1180 = vunpack.c.h.b16 %v531
        %v1181 = vunpack.c.l.b16 %v532
        %v1182 = vunpack.c.h.b16 %v532
        %v1183 = vunpack.c.l.b16 %v533
        %v1184 = vunpack.c.h.b16 %v533
        %v1185 = vunpack.c.l.b16 %v534
        %v1186 = vunpack.c.h.b16 %v534
        %v1187 = vunpack.c.l.b16 %v535
        %v1188 = vunpack.c.h.b16 %v535
        %v1189 = vunpack.c.l.b16 %v536
        %v1190 = vunpack.c.h.b16 %v536
        %v1191 = vunpack.c.l.b16 %v537
        %v1192 = vunpack.c.h.b16 %v537
        %v1193 = vunpack.c.l.b16 %v538
        %v1194 = vunpack.c.h.b16 %v538
        %v1195 = vunpack.c.l.b16 %v539
        %v1196 = vunpack.c.h.b16 %v539
        %v1197 = vunpack.c.l.b16 %v540
        %v1198 = vunpack.c.h.b16 %v540
        %v1199 = vunpack.c.l.b16 %v541
        %v1200 = vunpack.c.h.b16 %v541
        %v1201 = vunpack.c.l.b16 %v542
        %v1202 = vunpack.c.h.b16 %v542
        %v1203 = vunpack.c.l.b16 %v543
        %v1204 = vunpack.c.h.b16 %v543
        %v1205 = vunpack.c.l.b16 %v544
        %v1206 = vunpack.c.h.b16 %v544
        %v1207 = vunpack.c.l.b16 %v545
        %v1208 = vunpack.c.h.b16 %v545
        %v1209 = vunpack.c.l.b16 %v546
        %v1210 = vunpack.c.h.b16 %v546
        %v1211 = vunpack.c.l.b16 %v547
        %v1212 = vunpack.c.h.b16 %v547
        %v1213 = vunpack.c.l.b16 %v548
        %v1214 = vunpack.c.h.b16 %v548
        %v1215 = vunpack.c.l.b16 %v549
        %v1216 = vunpack.c.h.b16 %v549
        %v1217 = vunpack.c.l.b16 %v550
        %v1218 = vunpack.c.h.b16 %v550
        %v1219 = vunpack.c.l.b16 %v551
        %v1220 = vunpack.c.h.b16 %v551
        %v1221 = vunpack.c.l.b16 %v552
        %v1222 = vunpack.c.h.b16 %v552
        %v1223 = vunpack.c.l.b16 %v553
        %v1224 = vunpack.c.h.b16 %v553
        %v1225 = vunpack.c.l.b16 %v554
        %v1226 = vunpack.c.h.b16 %v554
        %v1227 = vunpack.c.l.b16 %v555
        %v1228 = vunpack.c.h.b16 %v555
        %v1229 = vunpack.c.l.b16 %v556
        %v1230 = vunpack.c.h.b16 %v556
        %v1231 = vunpack.c.l.b16 %v557
        %v1232 = vunpack.c.h.b16 %v557
        %v1233 = vunpack.c.l.b16 %v558
        %v1234 = vunpack.c.h.b16 %v558
        %v1235 = vunpack.c.l.b16 %v559
        %v1236 = vunpack.c.h.b16 %v559
        %v1237 = vunpack.c.l.b16 %v560
        %v1238 = vunpack.c.h.b16 %v560
        %v1239 = vunpack.c.l.b16 %v561
        %v1240 = vunpack.c.h.b16 %v561
        %v1241 = vunpack.c.l.b16 %v562
        %v1242 = vunpack.c.h.b16 %v562
        %v1243 = vunpack.c.l.b16 %v563
        %v1244 = vunpack.c.h.b16 %v563
        %v1245 = vunpack.c.l.b16 %v564
        %v1246 = vunpack.c.h.b16 %v564
        %v1247 = vunpack.c.l.b16 %v565
        %v1248 = vunpack.c.h.b16 %v565
        %v1249 = vunpack.c.l.b16 %v566
        %v1250 = vunpack.c.h.b16 %v566
        %v1251 = vunpack.c.l.b16 %v567
        %v1252 = vunpack.c.h.b16 %v567
        %v1253 = vunpack.c.l.b16 %v568
        %v1254 = vunpack.c.h.b16 %v568
        %v1255 = vunpack.c.l.b16 %v569
        %v1256 = vunpack.c.h.b16 %v569
        %v1257 = vunpack.c.l.b16 %v570
        %v1258 = vunpack.c.h.b16 %v570
        %v1259 = vunpack.c.l.b16 %v571
        %v1260 = vunpack.c.h.b16 %v571
        %v1261 = vunpack.c.l.b16 %v572
        %v1262 = vunpack.c.h.b16 %v572
        %v1263 = vunpack.c.l.b16 %v573
        %v1264 = vunpack.c.h.b16 %v573
        %v1265 = vunpack.c.l.b16 %v574
        %v1266 = vunpack.c.h.b16 %v574
        %v1267 = vunpack.c.l.b16 %v575
        %v1268 = vunpack.c.h.b16 %v575
        %v1269 = vunpack.c.l.b16 %v576
        %v1270 = vunpack.c.h.b16 %v576
        %v1271 = vunpack.c.l.b16 %v577
        %v1272 = vunpack.c.h.b16 %v577
        %v1273 = vunpack.c.l.b16 %v578
        %v1274 = vunpack.c.h.b16 %v578
        %v1275 = vunpack.c.l.b16 %v579
        %v1276 = vunpack.c.h.b16 %v579
        %v1277 = vunpack.c.l.b16 %v580
        %v1278 = vunpack.c.h.b16 %v580
        %v1279 = vunpack.c.l.b16 %v581
        %v1280 = vunpack.c.h.b16 %v581
        %v1281 = vunpack.c.l.b16 %v582
        %v1282 = vunpack.c.h.b16 %v582
        %v1283 = vunpack.c.l.b16 %v583
        %v1284 = vunpack.c.h.b16 %v583
        %v1285 = vunpack.c.l.b16 %v584
        %v1286 = vunpack.c.h.b16 %v584
        %v1287 = vunpack.c.l.b16 %v585
        %v1288 = vunpack.c.h.b16 %v585
        %v1289 = vunpack.c.l.b16 %v586
        %v1290 = vunpack.c.h.b16 %v586
        %v1291 = vunpack.c.l.b16 %v587
        %v1292 = vunpack.c.h.b16 %v587
        %v1293 = vunpack.c.l.b16 %v588
        %v1294 = vunpack.c.h.b16 %v588
        %v1295 = vunpack.c.l.b16 %v589
        %v1296 = vunpack.c.h.b16 %v589
        %v1297 = vunpack.c.l.b16 %v590
        %v1298 = vunpack.c.h.b16 %v590
        %v1299 = vunpack.c.l.b16 %v591
        %v1300 = vunpack.c.h.b16 %v591
        %v1301 = vunpack.c.l.b16 %v592
        %v1302 = vunpack.c.h.b16 %v592
        %v1303 = vunpack.c.l.b16 %v593
        %v1304 = vunpack.c.h.b16 %v593
        %v1305 = vunpack.c.l.b16 %v594
        %v1306 = vunpack.c.h.b16 %v594
        %v1307 = vunpack.c.l.b16 %v595
        %v1308 = vunpack.c.h.b16 %v595
        %v1309 = vunpack.c.l.b16 %v596
        %v1310 = vunpack.c.h.b16 %v596
        %v1311 = vunpack.c.l.b16 %v597
        %v1312 = vunpack.c.h.b16 %v597
        %v1313 = vunpack.c.l.b16 %v598
        %v1314 = vunpack.c.h.b16 %v598
        %v1315 = vunpack.c.l.b16 %v599
        %v1316 = vunpack.c.h.b16 %v599
        %v1317 = vunpack.c.l.b16 %v600
        %v1318 = vunpack.c.h.b16 %v600
        %v1319 = vunpack.c.l.b16 %v601
        %v1320 = vunpack.c.h.b16 %v601
        %v1321 = vunpack.c.l.b16 %v602
        %v1322 = vunpack.c.h.b16 %v602
        %v1323 = vunpack.c.l.b16 %v603
        %v1324 = vunpack.c.h.b16 %v603
        %v1325 = vunpack.c.l.b16 %v604
        %v1326 = vunpack.c.h.b16 %v604
        %v1327 = vunpack.c.l.b16 %v605
        %v1328 = vunpack.c.h.b16 %v605
        %v1329 = vunpack.c.l.b16 %v606
        %v1330 = vunpack.c.h.b16 %v606
        %v1331 = vunpack.c.l.b16 %v607
        %v1332 = vunpack.c.h.b16 %v607
        %v1333 = vunpack.c.l.b16 %v608
        %v1334 = vunpack.c.h.b16 %v608
        %v1335 = vunpack.c.l.b16 %v609
        %v1336 = vunpack.c.h.b16 %v609
        %v1337 = vunpack.c.l.b16 %v610
        %v1338 = vunpack.c.h.b16 %v610
        %v1339 = vunpack.c.l.b16 %v611
        %v1340 = vunpack.c.h.b16 %v611
        %v1341 = vunpack.c.l.b16 %v612
        %v1342 = vunpack.c.h.b16 %v612
        %v1343 = vunpack.c.l.b16 %v613
        %v1344 = vunpack.c.h.b16 %v613
        %v1345 = vunpack.c.l.b16 %v614
        %v1346 = vunpack.c.h.b16 %v614
        %v1347 = vunpack.c.l.b16 %v615
        %v1348 = vunpack.c.h.b16 %v615
        %v1349 = vunpack.c.l.b16 %v616
        %v1350 = vunpack.c.h.b16 %v616
        %v1351 = vunpack.c.l.b16 %v617
        %v1352 = vunpack.c.h.b16 %v617
        %v1353 = vunpack.c.l.b16 %v618
        %v1354 = vunpack.c.h.b16 %v618
        %v1355 = vunpack.c.l.b16 %v619
        %v1356 = vunpack.c.h.b16 %v619
        %v1357 = vunpack.c.l.b16 %v620
        %v1358 = vunpack.c.h.b16 %v620
        %v1359 = vunpack.c.l.b16 %v621
        %v1360 = vunpack.c.h.b16 %v621
        %v1361 = vunpack.c.l.b16 %v622
        %v1362 = vunpack.c.h.b16 %v622
        %v1363 = vunpack.c.l.b16 %v623
        %v1364 = vunpack.c.h.b16 %v623
        %v1365 = vunpack.c.l.b16 %v624
        %v1366 = vunpack.c.h.b16 %v624
        %v1367 = vunpack.c.l.b16 %v625
        %v1368 = vunpack.c.h.b16 %v625
        %v1369 = vunpack.c.l.b16 %v626
        %v1370 = vunpack.c.h.b16 %v626
        %v1371 = vunpack.c.l.b16 %v627
        %v1372 = vunpack.c.h.b16 %v627
        %v1373 = vunpack.c.l.b16 %v628
        %v1374 = vunpack.c.h.b16 %v628
        %v1375 = vunpack.c.l.b16 %v629
        %v1376 = vunpack.c.h.b16 %v629
        %v1377 = vunpack.c.l.b16 %v630
        %v1378 = vunpack.c.h.b16 %v630
        %v1379 = vunpack.c.l.b16 %v631
        %v1380 = vunpack.c.h.b16 %v631
        %v1381 = vunpack.c.l.b16 %v632
        %v1382 = vunpack.c.h.b16 %v632
        %v1383 = vunpack.c.l.b16 %v633
        %v1384 = vunpack.c.h.b16 %v633
        %v1385 = vunpack.c.l.b16 %v634
        %v1386 = vunpack.c.h.b16 %v634
        %v1387 = vunpack.c.l.b16 %v635
        %v1388 = vunpack.c.h.b16 %v635
        %v1389 = vunpack.c.l.b16 %v636
        %v1390 = vunpack.c.h.b16 %v636
        %v1391 = vunpack.c.l.b16 %v637
        %v1392 = vunpack.c.h.b16 %v637
        %v1393 = vunpack.c.l.b16 %v638
        %v1394 = vunpack.c.h.b16 %v638
        %v1395 = vunpack.c.l.b16 %v639
        %v1396 = vunpack.c.h.b16 %v639
        %v1397 = vunpack.c.l.b16 %v640
        %v1398 = vunpack.c.h.b16 %v640
        %v1399 = vunpack.c.l.b16 %v641
        %v1400 = vunpack.c.h.b16 %v641
        %v1401 = vunpack.c.l.b16 %v642
        %v1402 = vunpack.c.h.b16 %v642
        %v1403 = vunpack.c.l.b16 %v643
        %v1404 = vunpack.c.h.b16 %v643
        %v1405 = vunpack.c.l.b16 %v644
        %v1406 = vunpack.c.h.b16 %v644
        %v1407 = vunpack.c.l.b16 %v645
        %v1408 = vunpack.c.h.b16 %v645
        %v1409 = vunpack.c.l.b16 %v646
        %v1410 = vunpack.c.h.b16 %v646
        %v1411 = vunpack.c.l.b16 %v647
        %v1412 = vunpack.c.h.b16 %v647
        %v1413 = vunpack.c.l.b16 %v648
        %v1414 = vunpack.c.h.b16 %v648
        %v1415 = vunpack.c.l.b16 %v649
        %v1416 = vunpack.c.h.b16 %v649
        %v1417 = vunpack.c.l.b16 %v650
        %v1418 = vunpack.c.h.b16 %v650
        %v1419 = vunpack.c.l.b16 %v651
        %v1420 = vunpack.c.h.b16 %v651
        %v1421 = vunpack.c.l.b16 %v652
        %v1422 = vunpack.c.h.b16 %v652
        %v1423 = vunpack.c.l.b16 %v653
        %v1424 = vunpack.c.h.b16 %v653
        %v1425 = vunpack.c.l.b16 %v654
        %v1426 = vunpack.c.h.b16 %v654
        %v1427 = vunpack.c.l.b16 %v655
        %v1428 = vunpack.c.h.b16 %v655
        %v1429 = vunpack.c.l.b16 %v656
        %v1430 = vunpack.c.h.b16 %v656
        %v1431 = vunpack.c.l.b16 %v657
        %v1432 = vunpack.c.h.b16 %v657
        %v1433 = vpack.c.b16 %v937, %v921
        %v1434 = vpack.c.b16 %v938, %v922
        %v1435 = vpack.c.b16 %v939, %v923
        %v1436 = vpack.c.b16 %v940, %v924
        %v1437 = vpack.c.b16 %v941, %v925
        %v1438 = vpack.c.b16 %v942, %v926
        %v1439 = vpack.c.b16 %v943, %v927
        %v1440 = vpack.c.b16 %v944, %v928
        %v1441 = vpack.c.b16 %v945, %v929
        %v1442 = vpack.c.b16 %v946, %v930
        %v1443 = vpack.c.b16 %v947, %v931
        %v1444 = vpack.c.b16 %v948, %v932
        %v1445 = vpack.c.b16 %v949, %v933
        %v1446 = vpack.c.b16 %v950, %v934
        %v1447 = vpack.c.b16 %v951, %v935
        %v1448 = vpack.c.b16 %v952, %v936
        %v1449 = vpack.c.b16 %v969, %v953
        %v1450 = vpack.c.b16 %v970, %v954
        %v1451 = vpack.c.b16 %v971, %v955
        %v1452 = vpack.c.b16 %v972, %v956
        %v1453 = vpack.c.b16 %v973, %v957
        %v1454 = vpack.c.b16 %v974, %v958
        %v1455 = vpack.c.b16 %v975, %v959
        %v1456 = vpack.c.b16 %v976, %v960
        %v1457 = vpack.c.b16 %v977, %v961
        %v1458 = vpack.c.b16 %v978, %v962
        %v1459 = vpack.c.b16 %v979, %v963
        %v1460 = vpack.c.b16 %v980, %v964
        %v1461 = vpack.c.b16 %v981, %v965
        %v1462 = vpack.c.b16 %v982, %v966
        %v1463 = vpack.c.b16 %v983, %v967
        %v1464 = vpack.c.b16 %v984, %v968
        %v1465 = vpack.c.b16 %v1001, %v985
        %v1466 = vpack.c.b16 %v1002, %v986
        %v1467 = vpack.c.b16 %v1003, %v987
        %v1468 = vpack.c.b16 %v1004, %v988
        %v1469 = vpack.c.b16 %v1005, %v989
        %v1470 = vpack.c.b16 %v1006, %v990
        %v1471 = vpack.c.b16 %v1007, %v991
        %v1472 = vpack.c.b16 %v1008, %v992
        %v1473 = vpack.c.b16 %v1009, %v993
        %v1474 = vpack.c.b16 %v1010, %v994
        %v1475 = vpack.c.b16 %v1011, %v995
        %v1476 = vpack.c.b16 %v1012, %v996
        %v1477 = vpack.c.b16 %v1013, %v997
        %v1478 = vpack.c.b16 %v1014, %v998
        %v1479 = vpack.c.b16 %v1015, %v999
        %v1480 = vpack.c.b16 %v1016, %v1000
        %v1481 = vpack.c.b16 %v1033, %v1017
        %v1482 = vpack.c.b16 %v1034, %v1018
        %v1483 = vpack.c.b16 %v1035, %v1019
        %v1484 = vpack.c.b16 %v1036, %v1020
        %v1485 = vpack.c.b16 %v1037, %v1021
        %v1486 = vpack.c.b16 %v1038, %v1022
        %v1487 = vpack.c.b16 %v1039, %v1023
        %v1488 = vpack.c.b16 %v1040, %v1024
        %v1489 = vpack.c.b16 %v1041, %v1025
        %v1490 = vpack.c.b16 %v1042, %v1026
        %v1491 = vpack.c.b16 %v1043, %v1027
        %v1492 = vpack.c.b16 %v1044, %v1028
        %v1493 = vpack.c.b16 %v1045, %v1029
        %v1494 = vpack.c.b16 %v1046, %v1030
        %v1495 = vpack.c.b16 %v1047, %v1031
        %v1496 = vpack.c.b16 %v1048, %v1032
        %v1497 = vpack.c.b16 %v1065, %v1049
        %v1498 = vpack.c.b16 %v1066, %v1050
        %v1499 = vpack.c.b16 %v1067, %v1051
        %v1500 = vpack.c.b16 %v1068, %v1052
        %v1501 = vpack.c.b16 %v1069, %v1053
        %v1502 = vpack.c.b16 %v1070, %v1054
        %v1503 = vpack.c.b16 %v1071, %v1055
        %v1504 = vpack.c.b16 %v1072, %v1056
        %v1505 = vpack.c.b16 %v1073, %v1057
        %v1506 = vpack.c.b16 %v1074, %v1058
        %v1507 = vpack.c.b16 %v1075, %v1059
        %v1508 = vpack.c.b16 %v1076, %v1060
        %v1509 = vpack.c.b16 %v1077, %v1061
        %v1510 = vpack.c.b16 %v1078, %v1062
        %v1511 = vpack.c.b16 %v1079, %v1063
        %v1512 = vpack.c.b16 %v1080, %v1064
        %v1513 = vpack.c.b16 %v1097, %v1081
        %v1514 = vpack.c.b16 %v1098, %v1082
        %v1515 = vpack.c.b16 %v1099, %v1083
        %v1516 = vpack.c.b16 %v1100, %v1084
        %v1517 = vpack.c.b16 %v1101, %v1085
        %v1518 = vpack.c.b16 %v1102, %v1086
        %v1519 = vpack.c.b16 %v1103, %v1087
        %v1520 = vpack.c.b16 %v1104, %v1088
        %v1521 = vpack.c.b16 %v1105, %v1089
        %v1522 = vpack.c.b16 %v1106, %v1090
        %v1523 = vpack.c.b16 %v1107, %v1091
        %v1524 = vpack.c.b16 %v1108, %v1092
        %v1525 = vpack.c.b16 %v1109, %v1093
        %v1526 = vpack.c.b16 %v1110, %v1094
        %v1527 = vpack.c.b16 %v1111, %v1095
        %v1528 = vpack.c.b16 %v1112, %v1096
        %v1529 = vpack.c.b16 %v1129, %v1113
        %v1530 = vpack.c.b16 %v1130, %v1114
        %v1531 = vpack.c.b16 %v1131, %v1115
        %v1532 = vpack.c.b16 %v1132, %v1116
        %v1533 = vpack.c.b16 %v1133, %v1117
        %v1534 = vpack.c.b16 %v1134, %v1118
        %v1535 = vpack.c.b16 %v1135, %v1119
        %v1536 = vpack.c.b16 %v1136, %v1120
        %v1537 = vpack.c.b16 %v1137, %v1121
        %v1538 = vpack.c.b16 %v1138, %v1122
        %v1539 = vpack.c.b16 %v1139, %v1123
        %v1540 = vpack.c.b16 %v1140, %v1124
        %v1541 = vpack.c.b16 %v1141, %v1125
        %v1542 = vpack.c.b16 %v1142, %v1126
        %v1543 = vpack.c.b16 %v1143, %v1127
        %v1544 = vpack.c.b16 %v1144, %v1128
        %v1545 = vpack.c.b16 %v1161, %v1145
        %v1546 = vpack.c.b16 %v1162, %v1146
        %v1547 = vpack.c.b16 %v1163, %v1147
        %v1548 = vpack.c.b16 %v1164, %v1148
        %v1549 = vpack.c.b16 %v1165, %v1149
        %v1550 = vpack.c.b16 %v1166, %v1150
        %v1551 = vpack.c.b16 %v1167, %v1151
        %v1552 = vpack.c.b16 %v1168, %v1152
        %v1553 = vpack.c.b16 %v1169, %v1153
        %v1554 = vpack.c.b16 %v1170, %v1154
        %v1555 = vpack.c.b16 %v1171, %v1155
        %v1556 = vpack.c.b16 %v1172, %v1156
        %v1557 = vpack.c.b16 %v1173, %v1157
        %v1558 = vpack.c.b16 %v1174, %v1158
        %v1559 = vpack.c.b16 %v1175, %v1159
        %v1560 = vpack.c.b16 %v1176, %v1160
        %v1561 = vpack.c.b16 %v1193, %v1177
        %v1562 = vpack.c.b16 %v1194, %v1178
        %v1563 = vpack.c.b16 %v1195, %v1179
        %v1564 = vpack.c.b16 %v1196, %v1180
        %v1565 = vpack.c.b16 %v1197, %v1181
        %v1566 = vpack.c.b16 %v1198, %v1182
        %v1567 = vpack.c.b16 %v1199, %v1183
        %v1568 = vpack.c.b16 %v1200, %v1184
        %v1569 = vpack.c.b16 %v1201, %v1185
        %v1570 = vpack.c.b16 %v1202, %v1186
        %v1571 = vpack.c.b16 %v1203, %v1187
        %v1572 = vpack.c.b16 %v1204, %v1188
        %v1573 = vpack.c.b16 %v1205, %v1189
        %v1574 = vpack.c.b16 %v1206, %v1190
        %v1575 = vpack.c.b16 %v1207, %v1191
        %v1576 = vpack.c.b16 %v1208, %v1192
        %v1577 = vpack.c.b16 %v1225, %v1209
        %v1578 = vpack.c.b16 %v1226, %v1210
        %v1579 = vpack.c.b16 %v1227, %v1211
        %v1580 = vpack.c.b16 %v1228, %v1212
        %v1581 = vpack.c.b16 %v1229, %v1213
        %v1582 = vpack.c.b16 %v1230, %v1214
        %v1583 = vpack.c.b16 %v1231, %v1215
        %v1584 = vpack.c.b16 %v1232, %v1216
        %v1585 = vpack.c.b16 %v1233, %v1217
        %v1586 = vpack.c.b16 %v1234, %v1218
        %v1587 = vpack.c.b16 %v1235, %v1219
        %v1588 = vpack.c.b16 %v1236, %v1220
        %v1589 = vpack.c.b16 %v1237, %v1221
        %v1590 = vpack.c.b16 %v1238, %v1222
        %v1591 = vpack.c.b16 %v1239, %v1223
        %v1592 = vpack.c.b16 %v1240, %v1224
        %v1593 = vpack.c.b16 %v1257, %v1241
        %v1594 = vpack.c.b16 %v1258, %v1242
        %v1595 = vpack.c.b16 %v1259, %v1243
        %v1596 = vpack.c.b16 %v1260, %v1244
        %v1597 = vpack.c.b16 %v1261, %v1245
        %v1598 = vpack.c.b16 %v1262, %v1246
        %v1599 = vpack.c.b16 %v1263, %v1247
        %v1600 = vpack.c.b16 %v1264, %v1248
        %v1601 = vpack.c.b16 %v1265, %v1249
        %v1602 = vpack.c.b16 %v1266, %v1250
        %v1603 = vpack.c.b16 %v1267, %v1251
        %v1604 = vpack.c.b16 %v1268, %v1252
        %v1605 = vpack.c.b16 %v1269, %v1253
        %v1606 = vpack.c.b16 %v1270, %v1254
        %v1607 = vpack.c.b16 %v1271, %v1255
        %v1608 = vpack.c.b16 %v1272, %v1256
        %v1609 = vpack.c.b16 %v1289, %v1273
        %v1610 = vpack.c.b16 %v1290, %v1274
        %v1611 = vpack.c.b16 %v1291, %v1275
        %v1612 = vpack.c.b16 %v1292, %v1276
        %v1613 = vpack.c.b16 %v1293, %v1277
        %v1614 = vpack.c.b16 %v1294, %v1278
        %v1615 = vpack.c.b16 %v1295, %v1279
        %v1616 = vpack.c.b16 %v1296, %v1280
        %v1617 = vpack.c.b16 %v1297, %v1281
        %v1618 = vpack.c.b16 %v1298, %v1282
        %v1619 = vpack.c.b16 %v1299, %v1283
        %v1620 = vpack.c.b16 %v1300, %v1284
        %v1621 = vpack.c.b16 %v1301, %v1285
        %v1622 = vpack.c.b16 %v1302, %v1286
        %v1623 = vpack.c.b16 %v1303, %v1287
        %v1624 = vpack.c.b16 %v1304, %v1288
        %v1625 = vpack.c.b16 %v1321, %v1305
        %v1626 = vpack.c.b16 %v1322, %v1306
        %v1627 = vpack.c.b16 %v1323, %v1307
        %v1628 = vpack.c.b16 %v1324, %v1308
        %v1629 = vpack.c.b16 %v1325, %v1309
        %v1630 = vpack.c.b16 %v1326, %v1310
        %v1631 = vpack.c.b16 %v1327, %v1311
        %v1632 = vpack.c.b16 %v1328, %v1312
        %v1633 = vpack.c.b16 %v1329, %v1313
        %v1634 = vpack.c.b16 %v1330, %v1314
        %v1635 = vpack.c.b16 %v1331, %v1315
        %v1636 = vpack.c.b16 %v1332, %v1316
        %v1637 = vpack.c.b16 %v1333, %v1317
        %v1638 = vpack.c.b16 %v1334, %v1318
        %v1639 = vpack.c.b16 %v1335, %v1319
        %v1640 = vpack.c.b16 %v1336, %v1320
        %v1641 = vpack.c.b16 %v1353, %v1337
        %v1642 = vpack.c.b16 %v1354, %v1338
        %v1643 = vpack.c.b16 %v1355, %v1339
        %v1644 = vpack.c.b16 %v1356, %v1340
        %v1645 = vpack.c.b16 %v1357, %v1341
        %v1646 = vpack.c.b16 %v1358, %v1342
        %v1647 = vpack.c.b16 %v1359, %v1343
        %v1648 = vpack.c.b16 %v1360, %v1344
        %v1649 = vpack.c.b16 %v1361, %v1345
        %v1650 = vpack.c.b16 %v1362, %v1346
        %v1651 = vpack.c.b16 %v1363, %v1347
        %v1652 = vpack.c.b16 %v1364, %v1348
        %v1653 = vpack.c.b16 %v1365, %v1349
        %v1654 = vpack.c.b16 %v1366, %v1350
        %v1655 = vpack.c.b16 %v1367, %v1351
        %v1656 = vpack.c.b16 %v1368, %v1352
        %v1657 = vpack.c.b16 %v1385, %v1369
        %v1658 = vpack.c.b16 %v1386, %v1370
        %v1659 = vpack.c.b16 %v1387, %v1371
        %v1660 = vpack.c.b16 %v1388, %v1372
        %v1661 = vpack.c.b16 %v1389, %v1373
        %v1662 = vpack.c.b16 %v1390, %v1374
        %v1663 = vpack.c.b16 %v1391, %v1375
        %v1664 = vpack.c.b16 %v1392, %v1376
        %v1665 = vpack.c.b16 %v1393, %v1377
        %v1666 = vpack.c.b16 %v1394, %v1378
        %v1667 = vpack.c.b16 %v1395, %v1379
        %v1668 = vpack.c.b16 %v1396, %v1380
        %v1669 = vpack.c.b16 %v1397, %v1381
        %v1670 = vpack.c.b16 %v1398, %v1382
        %v1671 = vpack.c.b16 %v1399, %v1383
        %v1672 = vpack.c.b16 %v1400, %v1384
        %v1673 = vpack.c.b16 %v1417, %v1401
        %v1674 = vpack.c.b16 %v1418, %v1402
        %v1675 = vpack.c.b16 %v1419, %v1403
        %v1676 = vpack.c.b16 %v1420, %v1404
        %v1677 = vpack.c.b16 %v1421, %v1405
        %v1678 = vpack.c.b16 %v1422, %v1406
        %v1679 = vpack.c.b16 %v1423, %v1407
        %v1680 = vpack.c.b16 %v1424, %v1408
        %v1681 = vpack.c.b16 %v1425, %v1409
        %v1682 = vpack.c.b16 %v1426, %v1410
        %v1683 = vpack.c.b16 %v1427, %v1411
        %v1684 = vpack.c.b16 %v1428, %v1412
        %v1685 = vpack.c.b16 %v1429, %v1413
        %v1686 = vpack.c.b16 %v1430, %v1414
        %v1687 = vpack.c.b16 %v1431, %v1415
        %v1688 = vpack.c.b16 %v1432, %v1416
        %1945 = vmatpush.bf16.msra.mxu0 %v1545
        %1946 = vmatpush.bf16.msra.mxu0 %v1529
        %1947 = vmatpush.bf16.msra.mxu0 %v1513
        %1948 = vmatpush.bf16.msra.mxu0 %v1497
        %1949 = vmatpush.bf16.msra.mxu0 %v1481
        %1950 = vmatpush.bf16.msra.mxu0 %v1465
        %1951 = vmatpush.bf16.msra.mxu0 %v1449
        %1952 = vmatpush.bf16.msra.mxu0 %v1433
        %1953 = vmatmul.bf16.gmra.mxu0 %v661
        %v1954 = vpop.f32.mrf.mxu0
        %v1955 = vadd.f32 0.0, %v1954
        %v1956 = vpop.f32.mrf.mxu0
        %1957 = vdwg.mxu0
        %1958 = vmatpush.bf16.msra.mxu0 %v1673
        %1959 = vmatpush.bf16.msra.mxu0 %v1657
        %1960 = vmatpush.bf16.msra.mxu0 %v1641
        %1961 = vmatpush.bf16.msra.mxu0 %v1625
        %1962 = vmatpush.bf16.msra.mxu0 %v1609
        %1963 = vmatpush.bf16.msra.mxu0 %v1593
        %1964 = vmatpush.bf16.msra.mxu0 %v1577
        %1965 = vmatpush.bf16.msra.mxu0 %v1561
        %1966 = vmatmul.bf16.gmra.mxu0 %v662
        %v1967 = vpop.f32.mrf.mxu0
        %v1968 = vadd.f32 %v1955, %v1967
        %v1969 = vpop.f32.mrf.mxu0
        %1970 = vdwg.mxu0
        %1971 = vmatpush.bf16.msra.mxu0 %v1546
        %1972 = vmatpush.bf16.msra.mxu0 %v1530
        %1973 = vmatpush.bf16.msra.mxu0 %v1514
        %1974 = vmatpush.bf16.msra.mxu0 %v1498
        %1975 = vmatpush.bf16.msra.mxu0 %v1482
        %1976 = vmatpush.bf16.msra.mxu0 %v1466
        %1977 = vmatpush.bf16.msra.mxu0 %v1450
        %1978 = vmatpush.bf16.msra.mxu0 %v1434
        %1979 = vmatmul.bf16.gmra.mxu0 %v661
        %v1980 = vpop.f32.mrf.mxu0
        %v1981 = vadd.f32 0.0, %v1980
        %v1982 = vpop.f32.mrf.mxu0
        %1983 = vdwg.mxu0
        %1984 = vmatpush.bf16.msra.mxu0 %v1674
        %1985 = vmatpush.bf16.msra.mxu0 %v1658
        %1986 = vmatpush.bf16.msra.mxu0 %v1642
        %1987 = vmatpush.bf16.msra.mxu0 %v1626
        %1988 = vmatpush.bf16.msra.mxu0 %v1610
        %1989 = vmatpush.bf16.msra.mxu0 %v1594
        %1990 = vmatpush.bf16.msra.mxu0 %v1578
        %1991 = vmatpush.bf16.msra.mxu0 %v1562
        %1992 = vmatmul.bf16.gmra.mxu0 %v662
        %v1993 = vpop.f32.mrf.mxu0
        %v1994 = vadd.f32 %v1981, %v1993
        %v1995 = vpop.f32.mrf.mxu0
        %1996 = vdwg.mxu0
        %1997 = vmatpush.bf16.msra.mxu0 %v1547
        %1998 = vmatpush.bf16.msra.mxu0 %v1531
        %1999 = vmatpush.bf16.msra.mxu0 %v1515
        %2000 = vmatpush.bf16.msra.mxu0 %v1499
        %2001 = vmatpush.bf16.msra.mxu0 %v1483
        %2002 = vmatpush.bf16.msra.mxu0 %v1467
        %2003 = vmatpush.bf16.msra.mxu0 %v1451
        %2004 = vmatpush.bf16.msra.mxu0 %v1435
        %2005 = vmatmul.bf16.gmra.mxu0 %v661
        %v2006 = vpop.f32.mrf.mxu0
        %v2007 = vadd.f32 0.0, %v2006
        %v2008 = vpop.f32.mrf.mxu0
        %2009 = vdwg.mxu0
        %2010 = vmatpush.bf16.msra.mxu0 %v1675
        %2011 = vmatpush.bf16.msra.mxu0 %v1659
        %2012 = vmatpush.bf16.msra.mxu0 %v1643
        %2013 = vmatpush.bf16.msra.mxu0 %v1627
        %2014 = vmatpush.bf16.msra.mxu0 %v1611
        %2015 = vmatpush.bf16.msra.mxu0 %v1595
        %2016 = vmatpush.bf16.msra.mxu0 %v1579
        %2017 = vmatpush.bf16.msra.mxu0 %v1563
        %2018 = vmatmul.bf16.gmra.mxu0 %v662
        %v2019 = vpop.f32.mrf.mxu0
        %v2020 = vadd.f32 %v2007, %v2019
        %v2021 = vpop.f32.mrf.mxu0
        %2022 = vdwg.mxu0
        %2023 = vmatpush.bf16.msra.mxu0 %v1548
        %2024 = vmatpush.bf16.msra.mxu0 %v1532
        %2025 = vmatpush.bf16.msra.mxu0 %v1516
        %2026 = vmatpush.bf16.msra.mxu0 %v1500
        %2027 = vmatpush.bf16.msra.mxu0 %v1484
        %2028 = vmatpush.bf16.msra.mxu0 %v1468
        %2029 = vmatpush.bf16.msra.mxu0 %v1452
        %2030 = vmatpush.bf16.msra.mxu0 %v1436
        %2031 = vmatmul.bf16.gmra.mxu0 %v661
        %v2032 = vpop.f32.mrf.mxu0
        %v2033 = vadd.f32 0.0, %v2032
        %v2034 = vpop.f32.mrf.mxu0
        %2035 = vdwg.mxu0
        %2036 = vmatpush.bf16.msra.mxu0 %v1676
        %2037 = vmatpush.bf16.msra.mxu0 %v1660
        %2038 = vmatpush.bf16.msra.mxu0 %v1644
        %2039 = vmatpush.bf16.msra.mxu0 %v1628
        %2040 = vmatpush.bf16.msra.mxu0 %v1612
        %2041 = vmatpush.bf16.msra.mxu0 %v1596
        %2042 = vmatpush.bf16.msra.mxu0 %v1580
        %2043 = vmatpush.bf16.msra.mxu0 %v1564
        %2044 = vmatmul.bf16.gmra.mxu0 %v662
        %v2045 = vpop.f32.mrf.mxu0
        %v2046 = vadd.f32 %v2033, %v2045
        %v2047 = vpop.f32.mrf.mxu0
        %2048 = vdwg.mxu0
        %2049 = vmatpush.bf16.msra.mxu0 %v1549
        %2050 = vmatpush.bf16.msra.mxu0 %v1533
        %2051 = vmatpush.bf16.msra.mxu0 %v1517
        %2052 = vmatpush.bf16.msra.mxu0 %v1501
        %2053 = vmatpush.bf16.msra.mxu0 %v1485
        %2054 = vmatpush.bf16.msra.mxu0 %v1469
        %2055 = vmatpush.bf16.msra.mxu0 %v1453
        %2056 = vmatpush.bf16.msra.mxu0 %v1437
        %2057 = vmatmul.bf16.gmra.mxu0 %v661
        %v2058 = vpop.f32.mrf.mxu0
        %v2059 = vadd.f32 0.0, %v2058
        %v2060 = vpop.f32.mrf.mxu0
        %2061 = vdwg.mxu0
        %2062 = vmatpush.bf16.msra.mxu0 %v1677
        %2063 = vmatpush.bf16.msra.mxu0 %v1661
        %2064 = vmatpush.bf16.msra.mxu0 %v1645
        %2065 = vmatpush.bf16.msra.mxu0 %v1629
        %2066 = vmatpush.bf16.msra.mxu0 %v1613
        %2067 = vmatpush.bf16.msra.mxu0 %v1597
        %2068 = vmatpush.bf16.msra.mxu0 %v1581
        %2069 = vmatpush.bf16.msra.mxu0 %v1565
        %2070 = vmatmul.bf16.gmra.mxu0 %v662
        %v2071 = vpop.f32.mrf.mxu0
        %v2072 = vadd.f32 %v2059, %v2071
        %v2073 = vpop.f32.mrf.mxu0
        %2074 = vdwg.mxu0
        %2075 = vmatpush.bf16.msra.mxu0 %v1550
        %2076 = vmatpush.bf16.msra.mxu0 %v1534
        %2077 = vmatpush.bf16.msra.mxu0 %v1518
        %2078 = vmatpush.bf16.msra.mxu0 %v1502
        %2079 = vmatpush.bf16.msra.mxu0 %v1486
        %2080 = vmatpush.bf16.msra.mxu0 %v1470
        %2081 = vmatpush.bf16.msra.mxu0 %v1454
        %2082 = vmatpush.bf16.msra.mxu0 %v1438
        %2083 = vmatmul.bf16.gmra.mxu0 %v661
        %v2084 = vpop.f32.mrf.mxu0
        %v2085 = vadd.f32 0.0, %v2084
        %v2086 = vpop.f32.mrf.mxu0
        %2087 = vdwg.mxu0
        %2088 = vmatpush.bf16.msra.mxu0 %v1678
        %2089 = vmatpush.bf16.msra.mxu0 %v1662
        %2090 = vmatpush.bf16.msra.mxu0 %v1646
        %2091 = vmatpush.bf16.msra.mxu0 %v1630
        %2092 = vmatpush.bf16.msra.mxu0 %v1614
        %2093 = vmatpush.bf16.msra.mxu0 %v1598
        %2094 = vmatpush.bf16.msra.mxu0 %v1582
        %2095 = vmatpush.bf16.msra.mxu0 %v1566
        %2096 = vmatmul.bf16.gmra.mxu0 %v662
        %v2097 = vpop.f32.mrf.mxu0
        %v2098 = vadd.f32 %v2085, %v2097
        %v2099 = vpop.f32.mrf.mxu0
        %2100 = vdwg.mxu0
        %2101 = vmatpush.bf16.msra.mxu0 %v1551
        %2102 = vmatpush.bf16.msra.mxu0 %v1535
        %2103 = vmatpush.bf16.msra.mxu0 %v1519
        %2104 = vmatpush.bf16.msra.mxu0 %v1503
        %2105 = vmatpush.bf16.msra.mxu0 %v1487
        %2106 = vmatpush.bf16.msra.mxu0 %v1471
        %2107 = vmatpush.bf16.msra.mxu0 %v1455
        %2108 = vmatpush.bf16.msra.mxu0 %v1439
        %2109 = vmatmul.bf16.gmra.mxu0 %v661
        %v2110 = vpop.f32.mrf.mxu0
        %v2111 = vadd.f32 0.0, %v2110
        %v2112 = vpop.f32.mrf.mxu0
        %2113 = vdwg.mxu0
        %2114 = vmatpush.bf16.msra.mxu0 %v1679
        %2115 = vmatpush.bf16.msra.mxu0 %v1663
        %2116 = vmatpush.bf16.msra.mxu0 %v1647
        %2117 = vmatpush.bf16.msra.mxu0 %v1631
        %2118 = vmatpush.bf16.msra.mxu0 %v1615
        %2119 = vmatpush.bf16.msra.mxu0 %v1599
        %2120 = vmatpush.bf16.msra.mxu0 %v1583
        %2121 = vmatpush.bf16.msra.mxu0 %v1567
        %2122 = vmatmul.bf16.gmra.mxu0 %v662
        %v2123 = vpop.f32.mrf.mxu0
        %v2124 = vadd.f32 %v2111, %v2123
        %v2125 = vpop.f32.mrf.mxu0
        %2126 = vdwg.mxu0
        %2127 = vmatpush.bf16.msra.mxu0 %v1552
        %2128 = vmatpush.bf16.msra.mxu0 %v1536
        %2129 = vmatpush.bf16.msra.mxu0 %v1520
        %2130 = vmatpush.bf16.msra.mxu0 %v1504
        %2131 = vmatpush.bf16.msra.mxu0 %v1488
        %2132 = vmatpush.bf16.msra.mxu0 %v1472
        %2133 = vmatpush.bf16.msra.mxu0 %v1456
        %2134 = vmatpush.bf16.msra.mxu0 %v1440
        %2135 = vmatmul.bf16.gmra.mxu0 %v661
        %v2136 = vpop.f32.mrf.mxu0
        %v2137 = vadd.f32 0.0, %v2136
        %v2138 = vpop.f32.mrf.mxu0
        %2139 = vdwg.mxu0
        %2140 = vmatpush.bf16.msra.mxu0 %v1680
        %2141 = vmatpush.bf16.msra.mxu0 %v1664
        %2142 = vmatpush.bf16.msra.mxu0 %v1648
        %2143 = vmatpush.bf16.msra.mxu0 %v1632
        %2144 = vmatpush.bf16.msra.mxu0 %v1616
        %2145 = vmatpush.bf16.msra.mxu0 %v1600
        %2146 = vmatpush.bf16.msra.mxu0 %v1584
        %2147 = vmatpush.bf16.msra.mxu0 %v1568
        %2148 = vmatmul.bf16.gmra.mxu0 %v662
        %v2149 = vpop.f32.mrf.mxu0
        %v2150 = vadd.f32 %v2137, %v2149
        %v2151 = vpop.f32.mrf.mxu0
        %2152 = vdwg.mxu0
        %2153 = vmatpush.bf16.msra.mxu0 %v1553
        %2154 = vmatpush.bf16.msra.mxu0 %v1537
        %2155 = vmatpush.bf16.msra.mxu0 %v1521
        %2156 = vmatpush.bf16.msra.mxu0 %v1505
        %2157 = vmatpush.bf16.msra.mxu0 %v1489
        %2158 = vmatpush.bf16.msra.mxu0 %v1473
        %2159 = vmatpush.bf16.msra.mxu0 %v1457
        %2160 = vmatpush.bf16.msra.mxu0 %v1441
        %2161 = vmatmul.bf16.gmra.mxu0 %v661
        %v2162 = vpop.f32.mrf.mxu0
        %v2163 = vadd.f32 0.0, %v2162
        %v2164 = vpop.f32.mrf.mxu0
        %2165 = vdwg.mxu0
        %2166 = vmatpush.bf16.msra.mxu0 %v1681
        %2167 = vmatpush.bf16.msra.mxu0 %v1665
        %2168 = vmatpush.bf16.msra.mxu0 %v1649
        %2169 = vmatpush.bf16.msra.mxu0 %v1633
        %2170 = vmatpush.bf16.msra.mxu0 %v1617
        %2171 = vmatpush.bf16.msra.mxu0 %v1601
        %2172 = vmatpush.bf16.msra.mxu0 %v1585
        %2173 = vmatpush.bf16.msra.mxu0 %v1569
        %2174 = vmatmul.bf16.gmra.mxu0 %v662
        %v2175 = vpop.f32.mrf.mxu0
        %v2176 = vadd.f32 %v2163, %v2175
        %v2177 = vpop.f32.mrf.mxu0
        %2178 = vdwg.mxu0
        %2179 = vmatpush.bf16.msra.mxu0 %v1554
        %2180 = vmatpush.bf16.msra.mxu0 %v1538
        %2181 = vmatpush.bf16.msra.mxu0 %v1522
        %2182 = vmatpush.bf16.msra.mxu0 %v1506
        %2183 = vmatpush.bf16.msra.mxu0 %v1490
        %2184 = vmatpush.bf16.msra.mxu0 %v1474
        %2185 = vmatpush.bf16.msra.mxu0 %v1458
        %2186 = vmatpush.bf16.msra.mxu0 %v1442
        %2187 = vmatmul.bf16.gmra.mxu0 %v661
        %v2188 = vpop.f32.mrf.mxu0
        %v2189 = vadd.f32 0.0, %v2188
        %v2190 = vpop.f32.mrf.mxu0
        %2191 = vdwg.mxu0
        %2192 = vmatpush.bf16.msra.mxu0 %v1682
        %2193 = vmatpush.bf16.msra.mxu0 %v1666
        %2194 = vmatpush.bf16.msra.mxu0 %v1650
        %2195 = vmatpush.bf16.msra.mxu0 %v1634
        %2196 = vmatpush.bf16.msra.mxu0 %v1618
        %2197 = vmatpush.bf16.msra.mxu0 %v1602
        %2198 = vmatpush.bf16.msra.mxu0 %v1586
        %2199 = vmatpush.bf16.msra.mxu0 %v1570
        %2200 = vmatmul.bf16.gmra.mxu0 %v662
        %v2201 = vpop.f32.mrf.mxu0
        %v2202 = vadd.f32 %v2189, %v2201
        %v2203 = vpop.f32.mrf.mxu0
        %2204 = vdwg.mxu0
        %2205 = vmatpush.bf16.msra.mxu0 %v1555
        %2206 = vmatpush.bf16.msra.mxu0 %v1539
        %2207 = vmatpush.bf16.msra.mxu0 %v1523
        %2208 = vmatpush.bf16.msra.mxu0 %v1507
        %2209 = vmatpush.bf16.msra.mxu0 %v1491
        %2210 = vmatpush.bf16.msra.mxu0 %v1475
        %2211 = vmatpush.bf16.msra.mxu0 %v1459
        %2212 = vmatpush.bf16.msra.mxu0 %v1443
        %2213 = vmatmul.bf16.gmra.mxu0 %v661
        %v2214 = vpop.f32.mrf.mxu0
        %v2215 = vadd.f32 0.0, %v2214
        %v2216 = vpop.f32.mrf.mxu0
        %2217 = vdwg.mxu0
        %2218 = vmatpush.bf16.msra.mxu0 %v1683
        %2219 = vmatpush.bf16.msra.mxu0 %v1667
        %2220 = vmatpush.bf16.msra.mxu0 %v1651
        %2221 = vmatpush.bf16.msra.mxu0 %v1635
        %2222 = vmatpush.bf16.msra.mxu0 %v1619
        %2223 = vmatpush.bf16.msra.mxu0 %v1603
        %2224 = vmatpush.bf16.msra.mxu0 %v1587
        %2225 = vmatpush.bf16.msra.mxu0 %v1571
        %2226 = vmatmul.bf16.gmra.mxu0 %v662
        %v2227 = vpop.f32.mrf.mxu0
        %v2228 = vadd.f32 %v2215, %v2227
        %v2229 = vpop.f32.mrf.mxu0
        %2230 = vdwg.mxu0
        %2231 = vmatpush.bf16.msra.mxu0 %v1556
        %2232 = vmatpush.bf16.msra.mxu0 %v1540
        %2233 = vmatpush.bf16.msra.mxu0 %v1524
        %2234 = vmatpush.bf16.msra.mxu0 %v1508
        %2235 = vmatpush.bf16.msra.mxu0 %v1492
        %2236 = vmatpush.bf16.msra.mxu0 %v1476
        %2237 = vmatpush.bf16.msra.mxu0 %v1460
        %2238 = vmatpush.bf16.msra.mxu0 %v1444
        %2239 = vmatmul.bf16.gmra.mxu0 %v661
        %v2240 = vpop.f32.mrf.mxu0
        %v2241 = vadd.f32 0.0, %v2240
        %v2242 = vpop.f32.mrf.mxu0
        %2243 = vdwg.mxu0
        %2244 = vmatpush.bf16.msra.mxu0 %v1684
        %2245 = vmatpush.bf16.msra.mxu0 %v1668
        %2246 = vmatpush.bf16.msra.mxu0 %v1652
        %2247 = vmatpush.bf16.msra.mxu0 %v1636
        %2248 = vmatpush.bf16.msra.mxu0 %v1620
        %2249 = vmatpush.bf16.msra.mxu0 %v1604
        %2250 = vmatpush.bf16.msra.mxu0 %v1588
        %2251 = vmatpush.bf16.msra.mxu0 %v1572
        %2252 = vmatmul.bf16.gmra.mxu0 %v662
        %v2253 = vpop.f32.mrf.mxu0
        %v2254 = vadd.f32 %v2241, %v2253
        %v2255 = vpop.f32.mrf.mxu0
        %2256 = vdwg.mxu0
        %2257 = vmatpush.bf16.msra.mxu0 %v1557
        %2258 = vmatpush.bf16.msra.mxu0 %v1541
        %2259 = vmatpush.bf16.msra.mxu0 %v1525
        %2260 = vmatpush.bf16.msra.mxu0 %v1509
        %2261 = vmatpush.bf16.msra.mxu0 %v1493
        %2262 = vmatpush.bf16.msra.mxu0 %v1477
        %2263 = vmatpush.bf16.msra.mxu0 %v1461
        %2264 = vmatpush.bf16.msra.mxu0 %v1445
        %2265 = vmatmul.bf16.gmra.mxu0 %v661
        %v2266 = vpop.f32.mrf.mxu0
        %v2267 = vadd.f32 0.0, %v2266
        %v2268 = vpop.f32.mrf.mxu0
        %2269 = vdwg.mxu0
        %2270 = vmatpush.bf16.msra.mxu0 %v1685
        %2271 = vmatpush.bf16.msra.mxu0 %v1669
        %2272 = vmatpush.bf16.msra.mxu0 %v1653
        %2273 = vmatpush.bf16.msra.mxu0 %v1637
        %2274 = vmatpush.bf16.msra.mxu0 %v1621
        %2275 = vmatpush.bf16.msra.mxu0 %v1605
        %2276 = vmatpush.bf16.msra.mxu0 %v1589
        %2277 = vmatpush.bf16.msra.mxu0 %v1573
        %2278 = vmatmul.bf16.gmra.mxu0 %v662
        %v2279 = vpop.f32.mrf.mxu0
        %v2280 = vadd.f32 %v2267, %v2279
        %v2281 = vpop.f32.mrf.mxu0
        %2282 = vdwg.mxu0
        %2283 = vmatpush.bf16.msra.mxu0 %v1558
        %2284 = vmatpush.bf16.msra.mxu0 %v1542
        %2285 = vmatpush.bf16.msra.mxu0 %v1526
        %2286 = vmatpush.bf16.msra.mxu0 %v1510
        %2287 = vmatpush.bf16.msra.mxu0 %v1494
        %2288 = vmatpush.bf16.msra.mxu0 %v1478
        %2289 = vmatpush.bf16.msra.mxu0 %v1462
        %2290 = vmatpush.bf16.msra.mxu0 %v1446
        %2291 = vmatmul.bf16.gmra.mxu0 %v661
        %v2292 = vpop.f32.mrf.mxu0
        %v2293 = vadd.f32 0.0, %v2292
        %v2294 = vpop.f32.mrf.mxu0
        %2295 = vdwg.mxu0
        %2296 = vmatpush.bf16.msra.mxu0 %v1686
        %2297 = vmatpush.bf16.msra.mxu0 %v1670
        %2298 = vmatpush.bf16.msra.mxu0 %v1654
        %2299 = vmatpush.bf16.msra.mxu0 %v1638
        %2300 = vmatpush.bf16.msra.mxu0 %v1622
        %2301 = vmatpush.bf16.msra.mxu0 %v1606
        %2302 = vmatpush.bf16.msra.mxu0 %v1590
        %2303 = vmatpush.bf16.msra.mxu0 %v1574
        %2304 = vmatmul.bf16.gmra.mxu0 %v662
        %v2305 = vpop.f32.mrf.mxu0
        %v2306 = vadd.f32 %v2293, %v2305
        %v2307 = vpop.f32.mrf.mxu0
        %2308 = vdwg.mxu0
        %2309 = vmatpush.bf16.msra.mxu0 %v1559
        %2310 = vmatpush.bf16.msra.mxu0 %v1543
        %2311 = vmatpush.bf16.msra.mxu0 %v1527
        %2312 = vmatpush.bf16.msra.mxu0 %v1511
        %2313 = vmatpush.bf16.msra.mxu0 %v1495
        %2314 = vmatpush.bf16.msra.mxu0 %v1479
        %2315 = vmatpush.bf16.msra.mxu0 %v1463
        %2316 = vmatpush.bf16.msra.mxu0 %v1447
        %2317 = vmatmul.bf16.gmra.mxu0 %v661
        %v2318 = vpop.f32.mrf.mxu0
        %v2319 = vadd.f32 0.0, %v2318
        %v2320 = vpop.f32.mrf.mxu0
        %2321 = vdwg.mxu0
        %2322 = vmatpush.bf16.msra.mxu0 %v1687
        %2323 = vmatpush.bf16.msra.mxu0 %v1671
        %2324 = vmatpush.bf16.msra.mxu0 %v1655
        %2325 = vmatpush.bf16.msra.mxu0 %v1639
        %2326 = vmatpush.bf16.msra.mxu0 %v1623
        %2327 = vmatpush.bf16.msra.mxu0 %v1607
        %2328 = vmatpush.bf16.msra.mxu0 %v1591
        %2329 = vmatpush.bf16.msra.mxu0 %v1575
        %2330 = vmatmul.bf16.gmra.mxu0 %v662
        %v2331 = vpop.f32.mrf.mxu0
        %v2332 = vadd.f32 %v2319, %v2331
        %v2333 = vpop.f32.mrf.mxu0
        %2334 = vdwg.mxu0
        %2335 = vmatpush.bf16.msra.mxu0 %v1560
        %2336 = vmatpush.bf16.msra.mxu0 %v1544
        %2337 = vmatpush.bf16.msra.mxu0 %v1528
        %2338 = vmatpush.bf16.msra.mxu0 %v1512
        %2339 = vmatpush.bf16.msra.mxu0 %v1496
        %2340 = vmatpush.bf16.msra.mxu0 %v1480
        %2341 = vmatpush.bf16.msra.mxu0 %v1464
        %2342 = vmatpush.bf16.msra.mxu0 %v1448
        %2343 = vmatmul.bf16.gmra.mxu0 %v661
        %v2344 = vpop.f32.mrf.mxu0
        %v2345 = vadd.f32 0.0, %v2344
        %v2346 = vpop.f32.mrf.mxu0
        %2347 = vdwg.mxu0
        %2348 = vmatpush.bf16.msra.mxu0 %v1688
        %2349 = vmatpush.bf16.msra.mxu0 %v1672
        %2350 = vmatpush.bf16.msra.mxu0 %v1656
        %2351 = vmatpush.bf16.msra.mxu0 %v1640
        %2352 = vmatpush.bf16.msra.mxu0 %v1624
        %2353 = vmatpush.bf16.msra.mxu0 %v1608
        %2354 = vmatpush.bf16.msra.mxu0 %v1592
        %2355 = vmatpush.bf16.msra.mxu0 %v1576
        %2356 = vmatmul.bf16.gmra.mxu0 %v662
        %v2357 = vpop.f32.mrf.mxu0
        %v2358 = vadd.f32 %v2345, %v2357
        %v2359 = vpop.f32.mrf.mxu0
        %2360 = vdwg.mxu0
        %v2361 = vadd.f32 %v385, %v1968
        %v2362 = vadd.f32 %v386, %v1994
        %v2363 = vadd.f32 %v387, %v2020
        %v2364 = vadd.f32 %v388, %v2046
        %v2365 = vadd.f32 %v389, %v2072
        %v2366 = vadd.f32 %v390, %v2098
        %v2367 = vadd.f32 %v391, %v2124
        %v2368 = vadd.f32 %v392, %v2150
        %v2369 = vadd.f32 %v393, %v2176
        %v2370 = vadd.f32 %v394, %v2202
        %v2371 = vadd.f32 %v395, %v2228
        %v2372 = vadd.f32 %v396, %v2254
        %v2373 = vadd.f32 %v397, %v2280
        %v2374 = vadd.f32 %v398, %v2306
        %v2375 = vadd.f32 %v399, %v2332
        %v2376 = vadd.f32 %v400, %v2358
        %2377 = vst [vmem:[#allocation2] sm:$0xff] %v2361
        %2378 = vst [vmem:[#allocation2 + $0x8] sm:$0xff] %v2362
        %2379 = vst [vmem:[#allocation2 + $0x10] sm:$0xff] %v2363
        %2380 = vst [vmem:[#allocation2 + $0x18] sm:$0xff] %v2364
        %2381 = vst [vmem:[#allocation2 + $0x20] sm:$0xff] %v2365
        %2382 = vst [vmem:[#allocation2 + $0x28] sm:$0xff] %v2366
        %2383 = vst [vmem:[#allocation2 + $0x30] sm:$0xff] %v2367
        %2384 = vst [vmem:[#allocation2 + $0x38] sm:$0xff] %v2368
        %2385 = vst [vmem:[#allocation2 + $0x40] sm:$0xff] %v2369
        %2386 = vst [vmem:[#allocation2 + $0x48] sm:$0xff] %v2370
        %2387 = vst [vmem:[#allocation2 + $0x50] sm:$0xff] %v2371
        %2388 = vst [vmem:[#allocation2 + $0x58] sm:$0xff] %v2372
        %2389 = vst [vmem:[#allocation2 + $0x60] sm:$0xff] %v2373
        %2390 = vst [vmem:[#allocation2 + $0x68] sm:$0xff] %v2374
        %2391 = vst [vmem:[#allocation2 + $0x70] sm:$0xff] %v2375
        %2392 = vst [vmem:[#allocation2 + $0x78] sm:$0xff] %v2376
        %p2393 = scmp.eq.s32.totalorder %s26, 2
        // Predicated region
        $region73: #{tpu_custom_call.1} parent=43 // pred_check
          %p2394 = pneg %p2393
        $region74: #{tpu_custom_call.1} parent=43 // pred_check_branch
          %2396 = sbr.rel (%p2394) target = $region76
        $region75: #{tpu_custom_call.1} parent=43 // pred_region
          %v2397 = vld [vmem:[#allocation2] sm:$0xff]
          %v2398 = vld [vmem:[#allocation2 + $0x8] sm:$0xff]
          %v2399 = vld [vmem:[#allocation2 + $0x10] sm:$0xff]
          %v2400 = vld [vmem:[#allocation2 + $0x18] sm:$0xff]
          %v2401 = vld [vmem:[#allocation2 + $0x20] sm:$0xff]
          %v2402 = vld [vmem:[#allocation2 + $0x28] sm:$0xff]
          %v2403 = vld [vmem:[#allocation2 + $0x30] sm:$0xff]
          %v2404 = vld [vmem:[#allocation2 + $0x38] sm:$0xff]
          %v2405 = vld [vmem:[#allocation2 + $0x40] sm:$0xff]
          %v2406 = vld [vmem:[#allocation2 + $0x48] sm:$0xff]
          %v2407 = vld [vmem:[#allocation2 + $0x50] sm:$0xff]
          %v2408 = vld [vmem:[#allocation2 + $0x58] sm:$0xff]
          %v2409 = vld [vmem:[#allocation2 + $0x60] sm:$0xff]
          %v2410 = vld [vmem:[#allocation2 + $0x68] sm:$0xff]
          %v2411 = vld [vmem:[#allocation2 + $0x70] sm:$0xff]
          %v2412 = vld [vmem:[#allocation2 + $0x78] sm:$0xff]
          %v2413 = vld [vmem:[#allocation8] sm:$0xff]
          %v2414 = vld [vmem:[#allocation8 + $0x8] sm:$0xff]
          %v2415 = vld [vmem:[#allocation8 + $0x10] sm:$0xff]
          %v2416 = vld [vmem:[#allocation8 + $0x18] sm:$0xff]
          %v2417 = vld [vmem:[#allocation8 + $0x20] sm:$0xff]
          %v2418 = vld [vmem:[#allocation8 + $0x28] sm:$0xff]
          %v2419 = vld [vmem:[#allocation8 + $0x30] sm:$0xff]
          %v2420 = vld [vmem:[#allocation8 + $0x38] sm:$0xff]
          %v2421 = vld [vmem:[#allocation8 + $0x40] sm:$0xff]
          %v2422 = vld [vmem:[#allocation8 + $0x48] sm:$0xff]
          %v2423 = vld [vmem:[#allocation8 + $0x50] sm:$0xff]
          %v2424 = vld [vmem:[#allocation8 + $0x58] sm:$0xff]
          %v2425 = vld [vmem:[#allocation8 + $0x60] sm:$0xff]
          %v2426 = vld [vmem:[#allocation8 + $0x68] sm:$0xff]
          %v2427 = vld [vmem:[#allocation8 + $0x70] sm:$0xff]
          %v2428 = vld [vmem:[#allocation8 + $0x78] sm:$0xff]
          %v2429 = vld [vmem:[#allocation8 + $0x80] sm:$0xff]
          %v2430 = vld [vmem:[#allocation8 + $0x88] sm:$0xff]
          %v2431 = vld [vmem:[#allocation8 + $0x90] sm:$0xff]
          %v2432 = vld [vmem:[#allocation8 + $0x98] sm:$0xff]
          %v2433 = vld [vmem:[#allocation8 + $0xa0] sm:$0xff]
          %v2434 = vld [vmem:[#allocation8 + $0xa8] sm:$0xff]
          %v2435 = vld [vmem:[#allocation8 + $0xb0] sm:$0xff]
          %v2436 = vld [vmem:[#allocation8 + $0xb8] sm:$0xff]
          %v2437 = vld [vmem:[#allocation8 + $0xc0] sm:$0xff]
          %v2438 = vld [vmem:[#allocation8 + $0xc8] sm:$0xff]
          %v2439 = vld [vmem:[#allocation8 + $0xd0] sm:$0xff]
          %v2440 = vld [vmem:[#allocation8 + $0xd8] sm:$0xff]
          %v2441 = vld [vmem:[#allocation8 + $0xe0] sm:$0xff]
          %v2442 = vld [vmem:[#allocation8 + $0xe8] sm:$0xff]
          %v2443 = vld [vmem:[#allocation8 + $0xf0] sm:$0xff]
          %v2444 = vld [vmem:[#allocation8 + $0xf8] sm:$0xff]
          %v2445 = vld [vmem:[#allocation8 + $0x100] sm:$0xff]
          %v2446 = vld [vmem:[#allocation8 + $0x108] sm:$0xff]
          %v2447 = vld [vmem:[#allocation8 + $0x110] sm:$0xff]
          %v2448 = vld [vmem:[#allocation8 + $0x118] sm:$0xff]
          %v2449 = vld [vmem:[#allocation8 + $0x120] sm:$0xff]
          %v2450 = vld [vmem:[#allocation8 + $0x128] sm:$0xff]
          %v2451 = vld [vmem:[#allocation8 + $0x130] sm:$0xff]
          %v2452 = vld [vmem:[#allocation8 + $0x138] sm:$0xff]
          %v2453 = vld [vmem:[#allocation8 + $0x140] sm:$0xff]
          %v2454 = vld [vmem:[#allocation8 + $0x148] sm:$0xff]
          %v2455 = vld [vmem:[#allocation8 + $0x150] sm:$0xff]
          %v2456 = vld [vmem:[#allocation8 + $0x158] sm:$0xff]
          %v2457 = vld [vmem:[#allocation8 + $0x160] sm:$0xff]
          %v2458 = vld [vmem:[#allocation8 + $0x168] sm:$0xff]
          %v2459 = vld [vmem:[#allocation8 + $0x170] sm:$0xff]
          %v2460 = vld [vmem:[#allocation8 + $0x178] sm:$0xff]
          %v2461 = vld [vmem:[#allocation8 + $0x180] sm:$0xff]
          %v2462 = vld [vmem:[#allocation8 + $0x188] sm:$0xff]
          %v2463 = vld [vmem:[#allocation8 + $0x190] sm:$0xff]
          %v2464 = vld [vmem:[#allocation8 + $0x198] sm:$0xff]
          %v2465 = vld [vmem:[#allocation8 + $0x1a0] sm:$0xff]
          %v2466 = vld [vmem:[#allocation8 + $0x1a8] sm:$0xff]
          %v2467 = vld [vmem:[#allocation8 + $0x1b0] sm:$0xff]
          %v2468 = vld [vmem:[#allocation8 + $0x1b8] sm:$0xff]
          %v2469 = vld [vmem:[#allocation8 + $0x1c0] sm:$0xff]
          %v2470 = vld [vmem:[#allocation8 + $0x1c8] sm:$0xff]
          %v2471 = vld [vmem:[#allocation8 + $0x1d0] sm:$0xff]
          %v2472 = vld [vmem:[#allocation8 + $0x1d8] sm:$0xff]
          %v2473 = vld [vmem:[#allocation8 + $0x1e0] sm:$0xff]
          %v2474 = vld [vmem:[#allocation8 + $0x1e8] sm:$0xff]
          %v2475 = vld [vmem:[#allocation8 + $0x1f0] sm:$0xff]
          %v2476 = vld [vmem:[#allocation8 + $0x1f8] sm:$0xff]
          %v2477 = vld [vmem:[#allocation8 + $0x200] sm:$0xff]
          %v2478 = vld [vmem:[#allocation8 + $0x208] sm:$0xff]
          %v2479 = vld [vmem:[#allocation8 + $0x210] sm:$0xff]
          %v2480 = vld [vmem:[#allocation8 + $0x218] sm:$0xff]
          %v2481 = vld [vmem:[#allocation8 + $0x220] sm:$0xff]
          %v2482 = vld [vmem:[#allocation8 + $0x228] sm:$0xff]
          %v2483 = vld [vmem:[#allocation8 + $0x230] sm:$0xff]
          %v2484 = vld [vmem:[#allocation8 + $0x238] sm:$0xff]
          %v2485 = vld [vmem:[#allocation8 + $0x240] sm:$0xff]
          %v2486 = vld [vmem:[#allocation8 + $0x248] sm:$0xff]
          %v2487 = vld [vmem:[#allocation8 + $0x250] sm:$0xff]
          %v2488 = vld [vmem:[#allocation8 + $0x258] sm:$0xff]
          %v2489 = vld [vmem:[#allocation8 + $0x260] sm:$0xff]
          %v2490 = vld [vmem:[#allocation8 + $0x268] sm:$0xff]
          %v2491 = vld [vmem:[#allocation8 + $0x270] sm:$0xff]
          %v2492 = vld [vmem:[#allocation8 + $0x278] sm:$0xff]
          %v2493 = vld [vmem:[#allocation8 + $0x280] sm:$0xff]
          %v2494 = vld [vmem:[#allocation8 + $0x288] sm:$0xff]
          %v2495 = vld [vmem:[#allocation8 + $0x290] sm:$0xff]
          %v2496 = vld [vmem:[#allocation8 + $0x298] sm:$0xff]
          %v2497 = vld [vmem:[#allocation8 + $0x2a0] sm:$0xff]
          %v2498 = vld [vmem:[#allocation8 + $0x2a8] sm:$0xff]
          %v2499 = vld [vmem:[#allocation8 + $0x2b0] sm:$0xff]
          %v2500 = vld [vmem:[#allocation8 + $0x2b8] sm:$0xff]
          %v2501 = vld [vmem:[#allocation8 + $0x2c0] sm:$0xff]
          %v2502 = vld [vmem:[#allocation8 + $0x2c8] sm:$0xff]
          %v2503 = vld [vmem:[#allocation8 + $0x2d0] sm:$0xff]
          %v2504 = vld [vmem:[#allocation8 + $0x2d8] sm:$0xff]
          %v2505 = vld [vmem:[#allocation8 + $0x2e0] sm:$0xff]
          %v2506 = vld [vmem:[#allocation8 + $0x2e8] sm:$0xff]
          %v2507 = vld [vmem:[#allocation8 + $0x2f0] sm:$0xff]
          %v2508 = vld [vmem:[#allocation8 + $0x2f8] sm:$0xff]
          %v2509 = vld [vmem:[#allocation8 + $0x300] sm:$0xff]
          %v2510 = vld [vmem:[#allocation8 + $0x308] sm:$0xff]
          %v2511 = vld [vmem:[#allocation8 + $0x310] sm:$0xff]
          %v2512 = vld [vmem:[#allocation8 + $0x318] sm:$0xff]
          %v2513 = vld [vmem:[#allocation8 + $0x320] sm:$0xff]
          %v2514 = vld [vmem:[#allocation8 + $0x328] sm:$0xff]
          %v2515 = vld [vmem:[#allocation8 + $0x330] sm:$0xff]
          %v2516 = vld [vmem:[#allocation8 + $0x338] sm:$0xff]
          %v2517 = vld [vmem:[#allocation8 + $0x340] sm:$0xff]
          %v2518 = vld [vmem:[#allocation8 + $0x348] sm:$0xff]
          %v2519 = vld [vmem:[#allocation8 + $0x350] sm:$0xff]
          %v2520 = vld [vmem:[#allocation8 + $0x358] sm:$0xff]
          %v2521 = vld [vmem:[#allocation8 + $0x360] sm:$0xff]
          %v2522 = vld [vmem:[#allocation8 + $0x368] sm:$0xff]
          %v2523 = vld [vmem:[#allocation8 + $0x370] sm:$0xff]
          %v2524 = vld [vmem:[#allocation8 + $0x378] sm:$0xff]
          %v2525 = vld [vmem:[#allocation8 + $0x380] sm:$0xff]
          %v2526 = vld [vmem:[#allocation8 + $0x388] sm:$0xff]
          %v2527 = vld [vmem:[#allocation8 + $0x390] sm:$0xff]
          %v2528 = vld [vmem:[#allocation8 + $0x398] sm:$0xff]
          %v2529 = vld [vmem:[#allocation8 + $0x3a0] sm:$0xff]
          %v2530 = vld [vmem:[#allocation8 + $0x3a8] sm:$0xff]
          %v2531 = vld [vmem:[#allocation8 + $0x3b0] sm:$0xff]
          %v2532 = vld [vmem:[#allocation8 + $0x3b8] sm:$0xff]
          %v2533 = vld [vmem:[#allocation8 + $0x3c0] sm:$0xff]
          %v2534 = vld [vmem:[#allocation8 + $0x3c8] sm:$0xff]
          %v2535 = vld [vmem:[#allocation8 + $0x3d0] sm:$0xff]
          %v2536 = vld [vmem:[#allocation8 + $0x3d8] sm:$0xff]
          %v2537 = vld [vmem:[#allocation8 + $0x3e0] sm:$0xff]
          %v2538 = vld [vmem:[#allocation8 + $0x3e8] sm:$0xff]
          %v2539 = vld [vmem:[#allocation8 + $0x3f0] sm:$0xff]
          %v2540 = vld [vmem:[#allocation8 + $0x3f8] sm:$0xff]
          %v2541 = vld [vmem:[#allocation8 + $0x400] sm:$0xff]
          %v2542 = vld [vmem:[#allocation8 + $0x408] sm:$0xff]
          %v2543 = vld [vmem:[#allocation8 + $0x410] sm:$0xff]
          %v2544 = vld [vmem:[#allocation8 + $0x418] sm:$0xff]
          %v2545 = vld [vmem:[#allocation8 + $0x420] sm:$0xff]
          %v2546 = vld [vmem:[#allocation8 + $0x428] sm:$0xff]
          %v2547 = vld [vmem:[#allocation8 + $0x430] sm:$0xff]
          %v2548 = vld [vmem:[#allocation8 + $0x438] sm:$0xff]
          %v2549 = vld [vmem:[#allocation8 + $0x440] sm:$0xff]
          %v2550 = vld [vmem:[#allocation8 + $0x448] sm:$0xff]
          %v2551 = vld [vmem:[#allocation8 + $0x450] sm:$0xff]
          %v2552 = vld [vmem:[#allocation8 + $0x458] sm:$0xff]
          %v2553 = vld [vmem:[#allocation8 + $0x460] sm:$0xff]
          %v2554 = vld [vmem:[#allocation8 + $0x468] sm:$0xff]
          %v2555 = vld [vmem:[#allocation8 + $0x470] sm:$0xff]
          %v2556 = vld [vmem:[#allocation8 + $0x478] sm:$0xff]
          %v2557 = vld [vmem:[#allocation8 + $0x480] sm:$0xff]
          %v2558 = vld [vmem:[#allocation8 + $0x488] sm:$0xff]
          %v2559 = vld [vmem:[#allocation8 + $0x490] sm:$0xff]
          %v2560 = vld [vmem:[#allocation8 + $0x498] sm:$0xff]
          %v2561 = vld [vmem:[#allocation8 + $0x4a0] sm:$0xff]
          %v2562 = vld [vmem:[#allocation8 + $0x4a8] sm:$0xff]
          %v2563 = vld [vmem:[#allocation8 + $0x4b0] sm:$0xff]
          %v2564 = vld [vmem:[#allocation8 + $0x4b8] sm:$0xff]
          %v2565 = vld [vmem:[#allocation8 + $0x4c0] sm:$0xff]
          %v2566 = vld [vmem:[#allocation8 + $0x4c8] sm:$0xff]
          %v2567 = vld [vmem:[#allocation8 + $0x4d0] sm:$0xff]
          %v2568 = vld [vmem:[#allocation8 + $0x4d8] sm:$0xff]
          %v2569 = vld [vmem:[#allocation8 + $0x4e0] sm:$0xff]
          %v2570 = vld [vmem:[#allocation8 + $0x4e8] sm:$0xff]
          %v2571 = vld [vmem:[#allocation8 + $0x4f0] sm:$0xff]
          %v2572 = vld [vmem:[#allocation8 + $0x4f8] sm:$0xff]
          %v2573 = vld [vmem:[#allocation8 + $0x500] sm:$0xff]
          %v2574 = vld [vmem:[#allocation8 + $0x508] sm:$0xff]
          %v2575 = vld [vmem:[#allocation8 + $0x510] sm:$0xff]
          %v2576 = vld [vmem:[#allocation8 + $0x518] sm:$0xff]
          %v2577 = vld [vmem:[#allocation8 + $0x520] sm:$0xff]
          %v2578 = vld [vmem:[#allocation8 + $0x528] sm:$0xff]
          %v2579 = vld [vmem:[#allocation8 + $0x530] sm:$0xff]
          %v2580 = vld [vmem:[#allocation8 + $0x538] sm:$0xff]
          %v2581 = vld [vmem:[#allocation8 + $0x540] sm:$0xff]
          %v2582 = vld [vmem:[#allocation8 + $0x548] sm:$0xff]
          %v2583 = vld [vmem:[#allocation8 + $0x550] sm:$0xff]
          %v2584 = vld [vmem:[#allocation8 + $0x558] sm:$0xff]
          %v2585 = vld [vmem:[#allocation8 + $0x560] sm:$0xff]
          %v2586 = vld [vmem:[#allocation8 + $0x568] sm:$0xff]
          %v2587 = vld [vmem:[#allocation8 + $0x570] sm:$0xff]
          %v2588 = vld [vmem:[#allocation8 + $0x578] sm:$0xff]
          %v2589 = vld [vmem:[#allocation8 + $0x580] sm:$0xff]
          %v2590 = vld [vmem:[#allocation8 + $0x588] sm:$0xff]
          %v2591 = vld [vmem:[#allocation8 + $0x590] sm:$0xff]
          %v2592 = vld [vmem:[#allocation8 + $0x598] sm:$0xff]
          %v2593 = vld [vmem:[#allocation8 + $0x5a0] sm:$0xff]
          %v2594 = vld [vmem:[#allocation8 + $0x5a8] sm:$0xff]
          %v2595 = vld [vmem:[#allocation8 + $0x5b0] sm:$0xff]
          %v2596 = vld [vmem:[#allocation8 + $0x5b8] sm:$0xff]
          %v2597 = vld [vmem:[#allocation8 + $0x5c0] sm:$0xff]
          %v2598 = vld [vmem:[#allocation8 + $0x5c8] sm:$0xff]
          %v2599 = vld [vmem:[#allocation8 + $0x5d0] sm:$0xff]
          %v2600 = vld [vmem:[#allocation8 + $0x5d8] sm:$0xff]
          %v2601 = vld [vmem:[#allocation8 + $0x5e0] sm:$0xff]
          %v2602 = vld [vmem:[#allocation8 + $0x5e8] sm:$0xff]
          %v2603 = vld [vmem:[#allocation8 + $0x5f0] sm:$0xff]
          %v2604 = vld [vmem:[#allocation8 + $0x5f8] sm:$0xff]
          %v2605 = vld [vmem:[#allocation8 + $0x600] sm:$0xff]
          %v2606 = vld [vmem:[#allocation8 + $0x608] sm:$0xff]
          %v2607 = vld [vmem:[#allocation8 + $0x610] sm:$0xff]
          %v2608 = vld [vmem:[#allocation8 + $0x618] sm:$0xff]
          %v2609 = vld [vmem:[#allocation8 + $0x620] sm:$0xff]
          %v2610 = vld [vmem:[#allocation8 + $0x628] sm:$0xff]
          %v2611 = vld [vmem:[#allocation8 + $0x630] sm:$0xff]
          %v2612 = vld [vmem:[#allocation8 + $0x638] sm:$0xff]
          %v2613 = vld [vmem:[#allocation8 + $0x640] sm:$0xff]
          %v2614 = vld [vmem:[#allocation8 + $0x648] sm:$0xff]
          %v2615 = vld [vmem:[#allocation8 + $0x650] sm:$0xff]
          %v2616 = vld [vmem:[#allocation8 + $0x658] sm:$0xff]
          %v2617 = vld [vmem:[#allocation8 + $0x660] sm:$0xff]
          %v2618 = vld [vmem:[#allocation8 + $0x668] sm:$0xff]
          %v2619 = vld [vmem:[#allocation8 + $0x670] sm:$0xff]
          %v2620 = vld [vmem:[#allocation8 + $0x678] sm:$0xff]
          %v2621 = vld [vmem:[#allocation8 + $0x680] sm:$0xff]
          %v2622 = vld [vmem:[#allocation8 + $0x688] sm:$0xff]
          %v2623 = vld [vmem:[#allocation8 + $0x690] sm:$0xff]
          %v2624 = vld [vmem:[#allocation8 + $0x698] sm:$0xff]
          %v2625 = vld [vmem:[#allocation8 + $0x6a0] sm:$0xff]
          %v2626 = vld [vmem:[#allocation8 + $0x6a8] sm:$0xff]
          %v2627 = vld [vmem:[#allocation8 + $0x6b0] sm:$0xff]
          %v2628 = vld [vmem:[#allocation8 + $0x6b8] sm:$0xff]
          %v2629 = vld [vmem:[#allocation8 + $0x6c0] sm:$0xff]
          %v2630 = vld [vmem:[#allocation8 + $0x6c8] sm:$0xff]
          %v2631 = vld [vmem:[#allocation8 + $0x6d0] sm:$0xff]
          %v2632 = vld [vmem:[#allocation8 + $0x6d8] sm:$0xff]
          %v2633 = vld [vmem:[#allocation8 + $0x6e0] sm:$0xff]
          %v2634 = vld [vmem:[#allocation8 + $0x6e8] sm:$0xff]
          %v2635 = vld [vmem:[#allocation8 + $0x6f0] sm:$0xff]
          %v2636 = vld [vmem:[#allocation8 + $0x6f8] sm:$0xff]
          %v2637 = vld [vmem:[#allocation8 + $0x700] sm:$0xff]
          %v2638 = vld [vmem:[#allocation8 + $0x708] sm:$0xff]
          %v2639 = vld [vmem:[#allocation8 + $0x710] sm:$0xff]
          %v2640 = vld [vmem:[#allocation8 + $0x718] sm:$0xff]
          %v2641 = vld [vmem:[#allocation8 + $0x720] sm:$0xff]
          %v2642 = vld [vmem:[#allocation8 + $0x728] sm:$0xff]
          %v2643 = vld [vmem:[#allocation8 + $0x730] sm:$0xff]
          %v2644 = vld [vmem:[#allocation8 + $0x738] sm:$0xff]
          %v2645 = vld [vmem:[#allocation8 + $0x740] sm:$0xff]
          %v2646 = vld [vmem:[#allocation8 + $0x748] sm:$0xff]
          %v2647 = vld [vmem:[#allocation8 + $0x750] sm:$0xff]
          %v2648 = vld [vmem:[#allocation8 + $0x758] sm:$0xff]
          %v2649 = vld [vmem:[#allocation8 + $0x760] sm:$0xff]
          %v2650 = vld [vmem:[#allocation8 + $0x768] sm:$0xff]
          %v2651 = vld [vmem:[#allocation8 + $0x770] sm:$0xff]
          %v2652 = vld [vmem:[#allocation8 + $0x778] sm:$0xff]
          %v2653 = vld [vmem:[#allocation8 + $0x780] sm:$0xff]
          %v2654 = vld [vmem:[#allocation8 + $0x788] sm:$0xff]
          %v2655 = vld [vmem:[#allocation8 + $0x790] sm:$0xff]
          %v2656 = vld [vmem:[#allocation8 + $0x798] sm:$0xff]
          %v2657 = vld [vmem:[#allocation8 + $0x7a0] sm:$0xff]
          %v2658 = vld [vmem:[#allocation8 + $0x7a8] sm:$0xff]
          %v2659 = vld [vmem:[#allocation8 + $0x7b0] sm:$0xff]
          %v2660 = vld [vmem:[#allocation8 + $0x7b8] sm:$0xff]
          %v2661 = vld [vmem:[#allocation8 + $0x7c0] sm:$0xff]
          %v2662 = vld [vmem:[#allocation8 + $0x7c8] sm:$0xff]
          %v2663 = vld [vmem:[#allocation8 + $0x7d0] sm:$0xff]
          %v2664 = vld [vmem:[#allocation8 + $0x7d8] sm:$0xff]
          %v2665 = vld [vmem:[#allocation8 + $0x7e0] sm:$0xff]
          %v2666 = vld [vmem:[#allocation8 + $0x7e8] sm:$0xff]
          %v2667 = vld [vmem:[#allocation8 + $0x7f0] sm:$0xff]
          %v2668 = vld [vmem:[#allocation8 + $0x7f8] sm:$0xff]
          %v2669 = vld [vmem:[#allocation9] sm:$0x1]
          %v2671 = vperm.slane %v2669, 0
          %2673 = vmatpush.msra.mxu0 %v2428
          %2674 = vmatpush.msra.mxu0 %v2427
          %2675 = vmatpush.msra.mxu0 %v2426
          %2676 = vmatpush.msra.mxu0 %v2425
          %2677 = vmatpush.msra.mxu0 %v2424
          %2678 = vmatpush.msra.mxu0 %v2423
          %2679 = vmatpush.msra.mxu0 %v2422
          %2680 = vmatpush.msra.mxu0 %v2421
          %2681 = vmatpush.msra.mxu0 %v2420
          %2682 = vmatpush.msra.mxu0 %v2419
          %2683 = vmatpush.msra.mxu0 %v2418
          %2684 = vmatpush.msra.mxu0 %v2417
          %2685 = vmatpush.msra.mxu0 %v2416
          %2686 = vmatpush.msra.mxu0 %v2415
          %2687 = vmatpush.msra.mxu0 %v2414
          %2688 = vmatpush.msra.mxu0 %v2413
          %2689 = vmatmul.f32.gmra.mxu0 %v2397
          %v2690 = vpop.f32.mrf.mxu0
          %v2691 = vadd.f32 %v2671, %v2690
          %2692 = vdwg.mxu0
          %2693 = vmatpush.msra.mxu0 %v2444
          %2694 = vmatpush.msra.mxu0 %v2443
          %2695 = vmatpush.msra.mxu0 %v2442
          %2696 = vmatpush.msra.mxu0 %v2441
          %2697 = vmatpush.msra.mxu0 %v2440
          %2698 = vmatpush.msra.mxu0 %v2439
          %2699 = vmatpush.msra.mxu0 %v2438
          %2700 = vmatpush.msra.mxu0 %v2437
          %2701 = vmatpush.msra.mxu0 %v2436
          %2702 = vmatpush.msra.mxu0 %v2435
          %2703 = vmatpush.msra.mxu0 %v2434
          %2704 = vmatpush.msra.mxu0 %v2433
          %2705 = vmatpush.msra.mxu0 %v2432
          %2706 = vmatpush.msra.mxu0 %v2431
          %2707 = vmatpush.msra.mxu0 %v2430
          %2708 = vmatpush.msra.mxu0 %v2429
          %2709 = vmatmul.f32.gmra.mxu0 %v2398
          %v2710 = vpop.f32.mrf.mxu0
          %v2711 = vadd.f32 %v2691, %v2710
          %2712 = vdwg.mxu0
          %2713 = vmatpush.msra.mxu0 %v2460
          %2714 = vmatpush.msra.mxu0 %v2459
          %2715 = vmatpush.msra.mxu0 %v2458
          %2716 = vmatpush.msra.mxu0 %v2457
          %2717 = vmatpush.msra.mxu0 %v2456
          %2718 = vmatpush.msra.mxu0 %v2455
          %2719 = vmatpush.msra.mxu0 %v2454
          %2720 = vmatpush.msra.mxu0 %v2453
          %2721 = vmatpush.msra.mxu0 %v2452
          %2722 = vmatpush.msra.mxu0 %v2451
          %2723 = vmatpush.msra.mxu0 %v2450
          %2724 = vmatpush.msra.mxu0 %v2449
          %2725 = vmatpush.msra.mxu0 %v2448
          %2726 = vmatpush.msra.mxu0 %v2447
          %2727 = vmatpush.msra.mxu0 %v2446
          %2728 = vmatpush.msra.mxu0 %v2445
          %2729 = vmatmul.f32.gmra.mxu0 %v2399
          %v2730 = vpop.f32.mrf.mxu0
          %v2731 = vadd.f32 %v2711, %v2730
          %2732 = vdwg.mxu0
          %2733 = vmatpush.msra.mxu0 %v2476
          %2734 = vmatpush.msra.mxu0 %v2475
          %2735 = vmatpush.msra.mxu0 %v2474
          %2736 = vmatpush.msra.mxu0 %v2473
          %2737 = vmatpush.msra.mxu0 %v2472
          %2738 = vmatpush.msra.mxu0 %v2471
          %2739 = vmatpush.msra.mxu0 %v2470
          %2740 = vmatpush.msra.mxu0 %v2469
          %2741 = vmatpush.msra.mxu0 %v2468
          %2742 = vmatpush.msra.mxu0 %v2467
          %2743 = vmatpush.msra.mxu0 %v2466
          %2744 = vmatpush.msra.mxu0 %v2465
          %2745 = vmatpush.msra.mxu0 %v2464
          %2746 = vmatpush.msra.mxu0 %v2463
          %2747 = vmatpush.msra.mxu0 %v2462
          %2748 = vmatpush.msra.mxu0 %v2461
          %2749 = vmatmul.f32.gmra.mxu0 %v2400
          %v2750 = vpop.f32.mrf.mxu0
          %v2751 = vadd.f32 %v2731, %v2750
          %2752 = vdwg.mxu0
          %2753 = vmatpush.msra.mxu0 %v2492
          %2754 = vmatpush.msra.mxu0 %v2491
          %2755 = vmatpush.msra.mxu0 %v2490
          %2756 = vmatpush.msra.mxu0 %v2489
          %2757 = vmatpush.msra.mxu0 %v2488
          %2758 = vmatpush.msra.mxu0 %v2487
          %2759 = vmatpush.msra.mxu0 %v2486
          %2760 = vmatpush.msra.mxu0 %v2485
          %2761 = vmatpush.msra.mxu0 %v2484
          %2762 = vmatpush.msra.mxu0 %v2483
          %2763 = vmatpush.msra.mxu0 %v2482
          %2764 = vmatpush.msra.mxu0 %v2481
          %2765 = vmatpush.msra.mxu0 %v2480
          %2766 = vmatpush.msra.mxu0 %v2479
          %2767 = vmatpush.msra.mxu0 %v2478
          %2768 = vmatpush.msra.mxu0 %v2477
          %2769 = vmatmul.f32.gmra.mxu0 %v2401
          %v2770 = vpop.f32.mrf.mxu0
          %v2771 = vadd.f32 %v2751, %v2770
          %2772 = vdwg.mxu0
          %2773 = vmatpush.msra.mxu0 %v2508
          %2774 = vmatpush.msra.mxu0 %v2507
          %2775 = vmatpush.msra.mxu0 %v2506
          %2776 = vmatpush.msra.mxu0 %v2505
          %2777 = vmatpush.msra.mxu0 %v2504
          %2778 = vmatpush.msra.mxu0 %v2503
          %2779 = vmatpush.msra.mxu0 %v2502
          %2780 = vmatpush.msra.mxu0 %v2501
          %2781 = vmatpush.msra.mxu0 %v2500
          %2782 = vmatpush.msra.mxu0 %v2499
          %2783 = vmatpush.msra.mxu0 %v2498
          %2784 = vmatpush.msra.mxu0 %v2497
          %2785 = vmatpush.msra.mxu0 %v2496
          %2786 = vmatpush.msra.mxu0 %v2495
          %2787 = vmatpush.msra.mxu0 %v2494
          %2788 = vmatpush.msra.mxu0 %v2493
          %2789 = vmatmul.f32.gmra.mxu0 %v2402
          %v2790 = vpop.f32.mrf.mxu0
          %v2791 = vadd.f32 %v2771, %v2790
          %2792 = vdwg.mxu0
          %2793 = vmatpush.msra.mxu0 %v2524
          %2794 = vmatpush.msra.mxu0 %v2523
          %2795 = vmatpush.msra.mxu0 %v2522
          %2796 = vmatpush.msra.mxu0 %v2521
          %2797 = vmatpush.msra.mxu0 %v2520
          %2798 = vmatpush.msra.mxu0 %v2519
          %2799 = vmatpush.msra.mxu0 %v2518
          %2800 = vmatpush.msra.mxu0 %v2517
          %2801 = vmatpush.msra.mxu0 %v2516
          %2802 = vmatpush.msra.mxu0 %v2515
          %2803 = vmatpush.msra.mxu0 %v2514
          %2804 = vmatpush.msra.mxu0 %v2513
          %2805 = vmatpush.msra.mxu0 %v2512
          %2806 = vmatpush.msra.mxu0 %v2511
          %2807 = vmatpush.msra.mxu0 %v2510
          %2808 = vmatpush.msra.mxu0 %v2509
          %2809 = vmatmul.f32.gmra.mxu0 %v2403
          %v2810 = vpop.f32.mrf.mxu0
          %v2811 = vadd.f32 %v2791, %v2810
          %2812 = vdwg.mxu0
          %2813 = vmatpush.msra.mxu0 %v2540
          %2814 = vmatpush.msra.mxu0 %v2539
          %2815 = vmatpush.msra.mxu0 %v2538
          %2816 = vmatpush.msra.mxu0 %v2537
          %2817 = vmatpush.msra.mxu0 %v2536
          %2818 = vmatpush.msra.mxu0 %v2535
          %2819 = vmatpush.msra.mxu0 %v2534
          %2820 = vmatpush.msra.mxu0 %v2533
          %2821 = vmatpush.msra.mxu0 %v2532
          %2822 = vmatpush.msra.mxu0 %v2531
          %2823 = vmatpush.msra.mxu0 %v2530
          %2824 = vmatpush.msra.mxu0 %v2529
          %2825 = vmatpush.msra.mxu0 %v2528
          %2826 = vmatpush.msra.mxu0 %v2527
          %2827 = vmatpush.msra.mxu0 %v2526
          %2828 = vmatpush.msra.mxu0 %v2525
          %2829 = vmatmul.f32.gmra.mxu0 %v2404
          %v2830 = vpop.f32.mrf.mxu0
          %v2831 = vadd.f32 %v2811, %v2830
          %2832 = vdwg.mxu0
          %2833 = vmatpush.msra.mxu0 %v2556
          %2834 = vmatpush.msra.mxu0 %v2555
          %2835 = vmatpush.msra.mxu0 %v2554
          %2836 = vmatpush.msra.mxu0 %v2553
          %2837 = vmatpush.msra.mxu0 %v2552
          %2838 = vmatpush.msra.mxu0 %v2551
          %2839 = vmatpush.msra.mxu0 %v2550
          %2840 = vmatpush.msra.mxu0 %v2549
          %2841 = vmatpush.msra.mxu0 %v2548
          %2842 = vmatpush.msra.mxu0 %v2547
          %2843 = vmatpush.msra.mxu0 %v2546
          %2844 = vmatpush.msra.mxu0 %v2545
          %2845 = vmatpush.msra.mxu0 %v2544
          %2846 = vmatpush.msra.mxu0 %v2543
          %2847 = vmatpush.msra.mxu0 %v2542
          %2848 = vmatpush.msra.mxu0 %v2541
          %2849 = vmatmul.f32.gmra.mxu0 %v2405
          %v2850 = vpop.f32.mrf.mxu0
          %v2851 = vadd.f32 %v2831, %v2850
          %2852 = vdwg.mxu0
          %2853 = vmatpush.msra.mxu0 %v2572
          %2854 = vmatpush.msra.mxu0 %v2571
          %2855 = vmatpush.msra.mxu0 %v2570
          %2856 = vmatpush.msra.mxu0 %v2569
          %2857 = vmatpush.msra.mxu0 %v2568
          %2858 = vmatpush.msra.mxu0 %v2567
          %2859 = vmatpush.msra.mxu0 %v2566
          %2860 = vmatpush.msra.mxu0 %v2565
          %2861 = vmatpush.msra.mxu0 %v2564
          %2862 = vmatpush.msra.mxu0 %v2563
          %2863 = vmatpush.msra.mxu0 %v2562
          %2864 = vmatpush.msra.mxu0 %v2561
          %2865 = vmatpush.msra.mxu0 %v2560
          %2866 = vmatpush.msra.mxu0 %v2559
          %2867 = vmatpush.msra.mxu0 %v2558
          %2868 = vmatpush.msra.mxu0 %v2557
          %2869 = vmatmul.f32.gmra.mxu0 %v2406
          %v2870 = vpop.f32.mrf.mxu0
          %v2871 = vadd.f32 %v2851, %v2870
          %2872 = vdwg.mxu0
          %2873 = vmatpush.msra.mxu0 %v2588
          %2874 = vmatpush.msra.mxu0 %v2587
          %2875 = vmatpush.msra.mxu0 %v2586
          %2876 = vmatpush.msra.mxu0 %v2585
          %2877 = vmatpush.msra.mxu0 %v2584
          %2878 = vmatpush.msra.mxu0 %v2583
          %2879 = vmatpush.msra.mxu0 %v2582
          %2880 = vmatpush.msra.mxu0 %v2581
          %2881 = vmatpush.msra.mxu0 %v2580
          %2882 = vmatpush.msra.mxu0 %v2579
          %2883 = vmatpush.msra.mxu0 %v2578
          %2884 = vmatpush.msra.mxu0 %v2577
          %2885 = vmatpush.msra.mxu0 %v2576
          %2886 = vmatpush.msra.mxu0 %v2575
          %2887 = vmatpush.msra.mxu0 %v2574
          %2888 = vmatpush.msra.mxu0 %v2573
          %2889 = vmatmul.f32.gmra.mxu0 %v2407
          %v2890 = vpop.f32.mrf.mxu0
          %v2891 = vadd.f32 %v2871, %v2890
          %2892 = vdwg.mxu0
          %2893 = vmatpush.msra.mxu0 %v2604
          %2894 = vmatpush.msra.mxu0 %v2603
          %2895 = vmatpush.msra.mxu0 %v2602
          %2896 = vmatpush.msra.mxu0 %v2601
          %2897 = vmatpush.msra.mxu0 %v2600
          %2898 = vmatpush.msra.mxu0 %v2599
          %2899 = vmatpush.msra.mxu0 %v2598
          %2900 = vmatpush.msra.mxu0 %v2597
          %2901 = vmatpush.msra.mxu0 %v2596
          %2902 = vmatpush.msra.mxu0 %v2595
          %2903 = vmatpush.msra.mxu0 %v2594
          %2904 = vmatpush.msra.mxu0 %v2593
          %2905 = vmatpush.msra.mxu0 %v2592
          %2906 = vmatpush.msra.mxu0 %v2591
          %2907 = vmatpush.msra.mxu0 %v2590
          %2908 = vmatpush.msra.mxu0 %v2589
          %2909 = vmatmul.f32.gmra.mxu0 %v2408
          %v2910 = vpop.f32.mrf.mxu0
          %v2911 = vadd.f32 %v2891, %v2910
          %2912 = vdwg.mxu0
          %2913 = vmatpush.msra.mxu0 %v2620
          %2914 = vmatpush.msra.mxu0 %v2619
          %2915 = vmatpush.msra.mxu0 %v2618
          %2916 = vmatpush.msra.mxu0 %v2617
          %2917 = vmatpush.msra.mxu0 %v2616
          %2918 = vmatpush.msra.mxu0 %v2615
          %2919 = vmatpush.msra.mxu0 %v2614
          %2920 = vmatpush.msra.mxu0 %v2613
          %2921 = vmatpush.msra.mxu0 %v2612
          %2922 = vmatpush.msra.mxu0 %v2611
          %2923 = vmatpush.msra.mxu0 %v2610
          %2924 = vmatpush.msra.mxu0 %v2609
          %2925 = vmatpush.msra.mxu0 %v2608
          %2926 = vmatpush.msra.mxu0 %v2607
          %2927 = vmatpush.msra.mxu0 %v2606
          %2928 = vmatpush.msra.mxu0 %v2605
          %2929 = vmatmul.f32.gmra.mxu0 %v2409
          %v2930 = vpop.f32.mrf.mxu0
          %v2931 = vadd.f32 %v2911, %v2930
          %2932 = vdwg.mxu0
          %2933 = vmatpush.msra.mxu0 %v2636
          %2934 = vmatpush.msra.mxu0 %v2635
          %2935 = vmatpush.msra.mxu0 %v2634
          %2936 = vmatpush.msra.mxu0 %v2633
          %2937 = vmatpush.msra.mxu0 %v2632
          %2938 = vmatpush.msra.mxu0 %v2631
          %2939 = vmatpush.msra.mxu0 %v2630
          %2940 = vmatpush.msra.mxu0 %v2629
          %2941 = vmatpush.msra.mxu0 %v2628
          %2942 = vmatpush.msra.mxu0 %v2627
          %2943 = vmatpush.msra.mxu0 %v2626
          %2944 = vmatpush.msra.mxu0 %v2625
          %2945 = vmatpush.msra.mxu0 %v2624
          %2946 = vmatpush.msra.mxu0 %v2623
          %2947 = vmatpush.msra.mxu0 %v2622
          %2948 = vmatpush.msra.mxu0 %v2621
          %2949 = vmatmul.f32.gmra.mxu0 %v2410
          %v2950 = vpop.f32.mrf.mxu0
          %v2951 = vadd.f32 %v2931, %v2950
          %2952 = vdwg.mxu0
          %2953 = vmatpush.msra.mxu0 %v2652
          %2954 = vmatpush.msra.mxu0 %v2651
          %2955 = vmatpush.msra.mxu0 %v2650
          %2956 = vmatpush.msra.mxu0 %v2649
          %2957 = vmatpush.msra.mxu0 %v2648
          %2958 = vmatpush.msra.mxu0 %v2647
          %2959 = vmatpush.msra.mxu0 %v2646
          %2960 = vmatpush.msra.mxu0 %v2645
          %2961 = vmatpush.msra.mxu0 %v2644
          %2962 = vmatpush.msra.mxu0 %v2643
          %2963 = vmatpush.msra.mxu0 %v2642
          %2964 = vmatpush.msra.mxu0 %v2641
          %2965 = vmatpush.msra.mxu0 %v2640
          %2966 = vmatpush.msra.mxu0 %v2639
          %2967 = vmatpush.msra.mxu0 %v2638
          %2968 = vmatpush.msra.mxu0 %v2637
          %2969 = vmatmul.f32.gmra.mxu0 %v2411
          %v2970 = vpop.f32.mrf.mxu0
          %v2971 = vadd.f32 %v2951, %v2970
          %2972 = vdwg.mxu0
          %2973 = vmatpush.msra.mxu0 %v2668
          %2974 = vmatpush.msra.mxu0 %v2667
          %2975 = vmatpush.msra.mxu0 %v2666
          %2976 = vmatpush.msra.mxu0 %v2665
          %2977 = vmatpush.msra.mxu0 %v2664
          %2978 = vmatpush.msra.mxu0 %v2663
          %2979 = vmatpush.msra.mxu0 %v2662
          %2980 = vmatpush.msra.mxu0 %v2661
          %2981 = vmatpush.msra.mxu0 %v2660
          %2982 = vmatpush.msra.mxu0 %v2659
          %2983 = vmatpush.msra.mxu0 %v2658
          %2984 = vmatpush.msra.mxu0 %v2657
          %2985 = vmatpush.msra.mxu0 %v2656
          %2986 = vmatpush.msra.mxu0 %v2655
          %2987 = vmatpush.msra.mxu0 %v2654
          %2988 = vmatpush.msra.mxu0 %v2653
          %2989 = vmatmul.f32.gmra.mxu0 %v2412
          %v2990 = vpop.f32.mrf.mxu0
          %v2991 = vadd.f32 %v2971, %v2990
          %2992 = vdwg.mxu0
          %v2993 = vmax.f32 %v2991, 0.0
          %v2994 = vld [vmem:[#allocation11] sm:$0xff]
          %v2995 = vld [vmem:[#allocation11 + $0x8] sm:$0xff]
          %v2996 = vld [vmem:[#allocation11 + $0x10] sm:$0xff]
          %v2997 = vld [vmem:[#allocation11 + $0x18] sm:$0xff]
          %v2998 = vld [vmem:[#allocation11 + $0x20] sm:$0xff]
          %v2999 = vld [vmem:[#allocation11 + $0x28] sm:$0xff]
          %v3000 = vld [vmem:[#allocation11 + $0x30] sm:$0xff]
          %v3001 = vld [vmem:[#allocation11 + $0x38] sm:$0xff]
          %v3002 = vld [vmem:[#allocation11 + $0x40] sm:$0xff]
          %v3003 = vld [vmem:[#allocation11 + $0x48] sm:$0xff]
          %v3004 = vld [vmem:[#allocation11 + $0x50] sm:$0xff]
          %v3005 = vld [vmem:[#allocation11 + $0x58] sm:$0xff]
          %v3006 = vld [vmem:[#allocation11 + $0x60] sm:$0xff]
          %v3007 = vld [vmem:[#allocation11 + $0x68] sm:$0xff]
          %v3008 = vld [vmem:[#allocation11 + $0x70] sm:$0xff]
          %v3009 = vld [vmem:[#allocation11 + $0x78] sm:$0xff]
          %v3010 = vld [vmem:[#allocation12] sm:$0x1]
          %v3012 = vperm.slane %v3010, 0
          %3014 = vmatpush.msra.mxu0 %v3009
          %3015 = vmatpush.msra.mxu0 %v3008
          %3016 = vmatpush.msra.mxu0 %v3007
          %3017 = vmatpush.msra.mxu0 %v3006
          %3018 = vmatpush.msra.mxu0 %v3005
          %3019 = vmatpush.msra.mxu0 %v3004
          %3020 = vmatpush.msra.mxu0 %v3003
          %3021 = vmatpush.msra.mxu0 %v3002
          %3022 = vmatpush.msra.mxu0 %v3001
          %3023 = vmatpush.msra.mxu0 %v3000
          %3024 = vmatpush.msra.mxu0 %v2999
          %3025 = vmatpush.msra.mxu0 %v2998
          %3026 = vmatpush.msra.mxu0 %v2997
          %3027 = vmatpush.msra.mxu0 %v2996
          %3028 = vmatpush.msra.mxu0 %v2995
          %3029 = vmatpush.msra.mxu0 %v2994
          %3030 = vmatmul.f32.gmra.mxu0 %v2993
          %v3031 = vpop.f32.mrf.mxu0
          %v3032 = vadd.f32 %v3012, %v3031
          %3033 = vdwg.mxu0
          %v3034 = vlaneseq
          %v3035 = vand.u32 %v3034, 127
          %vm3036 = vcmp.lt.s32.totalorder %v3035, 3
          %v3037 = vsel %vm3036, %v3032, -inf
          %3038 = vmax.xlane.f32.xlu0 %v3037
          %v3039 = vpop.xlane.xlu0 %3038
          %v3040 = vsub.f32 %v3037, %v3039
          %v3041 = vmul.f32 %v3040, 1.442695
          %v3042 = vpow.pop %v3041
          %3043 = vadd.xlane.f32.xlu0 %v3042
          %v3044 = vpop.xlane.xlu0 %3043
          %v3045 = vrcp.pop %v3044
          %v3046 = vmul.f32 %v3042, %v3045
          %3047 = vst [vmem:[#allocation14] sm:$0xff] %v3046
        $region76: #{tpu_custom_call.1} parent=43 // pred_fallthru
          _
        // Predicated region
        $region77: #{tpu_custom_call.1} parent=43 // pred_check
          %p3048 = pneg %p175
        $region78: #{tpu_custom_call.1} parent=43 // pred_check_branch
          %3050 = sbr.rel (%p3048) target = $region80
        $region79: #{tpu_custom_call.1} parent=43 // pred_region
          %3052 = vsyncadd [#allocation5], 0
          %s3054 = sshll.u32 [#allocation14], 4
          %s3055 = int_to_ptr.vmem [resolvable:$true] %s3054
          %s3056 = sshll.u32 %s6, 4
          %s3057 = int_to_ptr.hbm [resolvable:$true] %s3056
          %3059 = dma.vmem_to_hbm [thread:$0]  %s3055, 128, %s3057, [#allocation5]
        $region80: #{tpu_custom_call.1} parent=43 // pred_fallthru
          _
        // Predicated region
        $region81: #{tpu_custom_call.1} parent=43 // pred_check
          %p3060 = pneg %p175
        $region82: #{tpu_custom_call.1} parent=43 // pred_check_branch
          %3062 = sbr.rel (%p3060) target = $region84
        $region83: #{tpu_custom_call.1} parent=43 // pred_region
          %3064 = dma.done [#allocation5], 128
        $region84: #{tpu_custom_call.1} parent=43 // pred_fallthru
          _
      $region44: #{tpu_custom_call.1} parent=5 // pred_fallthru
        _
      %p3065 = scmp.le.s32.totalorder 2, %s21
      // Predicated region
      $region85: #{tpu_custom_call.1} parent=5 // pred_check
        %p3066 = pneg %p3065
      $region86: #{tpu_custom_call.1} parent=5 // pred_check_branch
        %3068 = sbr.rel (%p3066) target = $region88
      $region87: #{tpu_custom_call.1} parent=5 // pred_region
        %s3069 = ssub.s32 %s21, 2
      $region88: #{tpu_custom_call.1} parent=5 // pred_fallthru
        _
    $region6: #{tpu_custom_call.1} parent=1 // loop_footer
      %s25 = sadd.s32 1, %s21
    $region7: #{tpu_custom_call.1} parent=1 // loop_footer_branch
      %20 = sbr.rel target = $region3
    $region8: #{tpu_custom_call.1} parent=1 // loop_exit
      _
    %3070 = vsyncpa [#allocation4], 1
    %s3071 = scalar_lea.sflag [#allocation4], 1
    %3072 = vsyncpa %s3071, 1
    %3073 = vsyncpa [#allocation7], 1
    %s3074 = scalar_lea.sflag [#allocation7], 1
    %3075 = vsyncpa %s3074, 1
    %3076 = vsyncpa [#allocation10], 1
    %3077 = vsyncpa [#allocation13], 1
    %3078 = vsyncpa [#allocation5], 1
    %s3079 = scalar_lea.sflag [#allocation5], 1
    %3080 = vsyncpa %s3079, 1

</llo_original>
